<compile_context>
chip_gen: v7x
topology: tpu7x:2x2x1
jax: 0.10.0
libtpu: 0.0.40
codegen_flags: <defaults>
</compile_context>

<pallas_src>
import jax
import jax.numpy as jnp
from jax.experimental import pallas as pl
from jax.experimental.pallas import tpu as pltpu

LATENT = 100          # PyTorch latent_size
LATENT_PAD = 128      # K dim padded (inside the kernel) to a full lane group
H1, H2, H3 = 128, 256, 512
OUT = 784             # 28 * 28
BN_EPS = 1e-5

# Offsets of the packed per-feature vectors inside one (1, VEC_LEN) f32 blob.
# All starts are lane-aligned (multiples of 128) -> free static slices.
_B1_OFF = 0
_G2_OFF = _B1_OFF + H1       # 128
_BE2_OFF = _G2_OFF + H2      # 384
_G3_OFF = _BE2_OFF + H2      # 640
_BE3_OFF = _G3_OFF + H3      # 1152
_B4_OFF = _BE3_OFF + H3      # 1664
VEC_LEN = _B4_OFF + OUT      # 2448


def _leaky_relu(x, slope=0.2):
    return jnp.where(x > 0, x, slope * x)


def _batchnorm_train(x, gamma, beta, inv_b):
    # BatchNorm1d training mode (biased variance over the batch axis):
    # single reduction pass (sum / sum-of-squares), then per-feature
    # scale/shift so the per-element epilogue is one fused multiply-add.
    s1 = jnp.sum(x, axis=0, keepdims=True)
    s2 = jnp.sum(x * x, axis=0, keepdims=True)
    mean = s1 * inv_b
    var = jnp.maximum(s2 * inv_b - mean * mean, 0.0)
    scale = jax.lax.rsqrt(var + BN_EPS) * gamma     # (1, H)
    shift = beta - mean * scale                     # (1, H)
    return x * scale + shift


def _mxu_dot(x_f32, w_bf16):
    # bf16 x bf16 MXU matmul with f32 accumulation.
    return jnp.dot(x_f32.astype(jnp.bfloat16), w_bf16,
                   preferred_element_type=jnp.float32)


def generator_kernel(z_ref, w1_ref, w2_ref, w3_ref, w4_ref, vec_ref,
                     out_ref, zpad_ref):
    B = zpad_ref.shape[0]
    inv_b = jnp.float32(1.0 / B)     # static per-logical-batch size

    # Static (free) slices of the packed per-feature vector blob.
    b1 = vec_ref[:, _B1_OFF:_B1_OFF + H1]
    g2 = vec_ref[:, _G2_OFF:_G2_OFF + H2]
    be2 = vec_ref[:, _BE2_OFF:_BE2_OFF + H2]
    g3 = vec_ref[:, _G3_OFF:_G3_OFF + H3]
    be3 = vec_ref[:, _BE3_OFF:_BE3_OFF + H3]
    b4 = vec_ref[:, _B4_OFF:_B4_OFF + OUT]

    # Zero-pad the latent K dim 100 -> 128 in VMEM (bit-identical result,
    # keeps the layer-1 matmul fully tile-aligned; no wrapper-side pad op).
    zpad_ref[...] = jnp.zeros_like(zpad_ref)
    zpad_ref[:, :LATENT] = z_ref[0]

    # Layer 1: Linear(100->128) + LeakyReLU
    h = _mxu_dot(zpad_ref[...], w1_ref[...]) + b1
    h = _leaky_relu(h)

    # Layer 2: Linear(128->256) + BatchNorm1d + LeakyReLU
    # (Linear bias dropped: it cancels exactly in the BN mean subtraction.)
    h = _mxu_dot(h, w2_ref[...])
    h = _leaky_relu(_batchnorm_train(h, g2, be2, inv_b))

    # Layer 3: Linear(256->512) + BatchNorm1d + LeakyReLU
    h = _mxu_dot(h, w3_ref[...])
    h = _leaky_relu(_batchnorm_train(h, g3, be3, inv_b))

    # Layer 4: Linear(512->784) + Tanh, stored directly as (B, 784).
    out_ref[0] = jnp.tanh(_mxu_dot(h, w4_ref[...]) + b4)


def prepare_params(params):
    """One-time: pad w1 rows 100->128 (zeros), cast weights to bf16, pack the
    small per-feature vectors into one lane-aligned (1, VEC_LEN) f32 blob.
    b2 / b3 are intentionally dropped: a per-feature bias immediately before
    train-mode BatchNorm cancels exactly in (x - mean)."""
    w1 = jnp.pad(params["w1"], ((0, LATENT_PAD - LATENT), (0, 0)))
    vec = jnp.concatenate(
        [params["b1"], params["g2"], params["be2"],
         params["g3"], params["be3"], params["b4"]],
        axis=1).astype(jnp.float32)
    assert vec.shape == (1, VEC_LEN), vec.shape
    return dict(
        w1=w1.astype(jnp.bfloat16),
        w2=params["w2"].astype(jnp.bfloat16),
        w3=params["w3"].astype(jnp.bfloat16),
        w4=params["w4"].astype(jnp.bfloat16),
        vec=vec,
    )


def generator_forward(z, prepped):
    """Forward pass.

    z: (B, LATENT)    -> (B, 1, 28, 28)      (one PyTorch module call)
       (N, B, LATENT) -> (N, B, 1, 28, 28)   (N independent module calls fused
                                              into one pallas_call; weights are
                                              DMA'd once and stay VMEM-resident
                                              across the grid; BN stats are
                                              per logical batch, matching N
                                              separate module calls)
    """
    squeeze = (z.ndim == 2)
    if squeeze:
        z = z[None]
    N, B, _ = z.shape
    p = prepped

    flops = int(2 * N * B * (LATENT_PAD * H1 + H1 * H2 + H2 * H3 + H3 * OUT))
    transcendentals = int(N * (B * OUT + H2 + H3))
    weight_bytes = sum(int(p[k].size) * p[k].dtype.itemsize
                       for k in ("w1", "w2", "w3", "w4", "vec"))
    bytes_accessed = int(z.size * 4 + weight_bytes + N * B * OUT * 4)

    # TODO(synk): on v7x a single logical batch could additionally be split
    # across the 2 TensorCores, but that needs a cross-core exchange of the BN
    # sum / sum-of-squares partials to keep batch statistics global (PyTorch
    # semantics); here only independent logical batches are parallelized.
    img = pl.pallas_call(
        generator_kernel,
        out_shape=jax.ShapeDtypeStruct((N, B, OUT), jnp.float32),
        grid_spec=pltpu.PrefetchScalarGridSpec(
            num_scalar_prefetch=0,
            grid=(N,),
            in_specs=[
                pl.BlockSpec((1, B, LATENT), lambda i: (i, 0, 0)),   # z tile
                pl.BlockSpec((LATENT_PAD, H1), lambda i: (0, 0)),    # w1 resident
                pl.BlockSpec((H1, H2), lambda i: (0, 0)),            # w2 resident
                pl.BlockSpec((H2, H3), lambda i: (0, 0)),            # w3 resident
                pl.BlockSpec((H3, OUT), lambda i: (0, 0)),           # w4 resident
                pl.BlockSpec((1, VEC_LEN), lambda i: (0, 0)),        # packed vecs
            ],
            out_specs=pl.BlockSpec((1, B, OUT), lambda i: (i, 0, 0)),
            scratch_shapes=[pltpu.VMEM((B, LATENT_PAD), jnp.float32)],
        ),
        compiler_params=pltpu.CompilerParams(
            dimension_semantics=("parallel",)),
        cost_estimate=pl.CostEstimate(
            flops=flops,
            transcendentals=transcendentals,
            bytes_accessed=bytes_accessed),
    )(z, p["w1"], p["w2"], p["w3"], p["w4"], p["vec"])

    # Free view: (N, B, 784) -> (N, B, 1, 28, 28)  (PyTorch NCHW view).
    img = img.reshape(N, B, 1, 28, 28)
    return img[0] if squeeze else img


def init_params(key):
    ks = jax.random.split(key, 4)
    scale = 0.05

    def lin(k, fan_in, fan_out):
        kw, kb = jax.random.split(k)
        # Stored as (in, out) so the kernel computes x @ W + b
        # (equivalent to PyTorch's x @ weight.T + bias).
        w = scale * jax.random.normal(kw, (fan_in, fan_out), dtype=jnp.float32)
        b = scale * jax.random.normal(kb, (1, fan_out), dtype=jnp.float32)
        return w, b

    w1, b1 = lin(ks[0], LATENT, H1)
    w2, b2 = lin(ks[1], H1, H2)
    w3, b3 = lin(ks[2], H2, H3)
    w4, b4 = lin(ks[3], H3, OUT)

    # BatchNorm affine params (PyTorch default init: gamma=1, beta=0).
    g2 = jnp.ones((1, H2), jnp.float32)
    be2 = jnp.zeros((1, H2), jnp.float32)
    g3 = jnp.ones((1, H3), jnp.float32)
    be3 = jnp.zeros((1, H3), jnp.float32)

    return dict(w1=w1, b1=b1, w2=w2, b2=b2, g2=g2, be2=be2,
                w3=w3, b3=b3, g3=g3, be3=be3, w4=w4, b4=b4)


if __name__ == "__main__":
    key = jax.random.PRNGKey(0)
    kz, kp = jax.random.split(key)

    # Small deterministic example: 2 logical batches of 32 latent vectors.
    N, B = 2, 32
    z = jax.random.normal(kz, (N, B, LATENT), dtype=jnp.float32)

    params = init_params(kp)
    prepped = prepare_params(params)

    # Fused path: both logical batches in one pallas_call (weights resident).
    img = jax.block_until_ready(generator_forward(z, prepped))
    assert img.shape == (N, B, 1, 28, 28), img.shape
    assert img.dtype == jnp.float32
    assert bool(jnp.all(jnp.isfinite(img)))
    assert bool(jnp.all(jnp.abs(img) <= 1.0))     # tanh output range

    # Single-batch path (matches one PyTorch forward) agrees with grid step 0.
    img0 = jax.block_until_ready(generator_forward(z[0], prepped))
    assert img0.shape == (B, 1, 28, 28), img0.shape
    assert bool(jnp.allclose(img0, img[0], atol=1e-5))

    print("KERNEL_OK")
</pallas_src>

<mosaic_0001>
module attributes {stable_mosaic.version = 11 : i64} {
  func.func @generator_kernel(%arg0: i32, %arg1: memref<1x32x100xf32, #tpu.memory_space<vmem>>, %arg2: memref<128x128xbf16, #tpu.memory_space<vmem>>, %arg3: memref<128x256xbf16, #tpu.memory_space<vmem>>, %arg4: memref<256x512xbf16, #tpu.memory_space<vmem>>, %arg5: memref<512x784xbf16, #tpu.memory_space<vmem>>, %arg6: memref<1x2448xf32, #tpu.memory_space<vmem>>, %arg7: memref<1x32x784xf32, #tpu.memory_space<vmem>>, %arg8: memref<32x128xf32, #tpu.memory_space<vmem>>) attributes {dimension_semantics = [#tpu.dimension_semantics<parallel>], iteration_bounds = array<i64: 2>, scalar_prefetch = 0 : i64, scratch_operands = 1 : i64, tpu.core_type = #tpu.core_type<tc>, window_params = [{transform_indices = @transform_0, window_bounds = array<i64: 1, 32, 100>}, {pipeline_mode = #tpu.pipeline_mode<synchronous>, transform_indices = @transform_1, window_bounds = array<i64: 128, 128>}, {pipeline_mode = #tpu.pipeline_mode<synchronous>, transform_indices = @transform_2, window_bounds = array<i64: 128, 256>}, {pipeline_mode = #tpu.pipeline_mode<synchronous>, transform_indices = @transform_3, window_bounds = array<i64: 256, 512>}, {pipeline_mode = #tpu.pipeline_mode<synchronous>, transform_indices = @transform_4, window_bounds = array<i64: 512, 784>}, {pipeline_mode = #tpu.pipeline_mode<synchronous>, transform_indices = @transform_5, window_bounds = array<i64: 1, 2448>}, {transform_indices = @transform_6, window_bounds = array<i64: 1, 32, 784>}]} {
    %c0 = arith.constant 0 : index
    %c0_0 = arith.constant 0 : index
    %0 = vector.load %arg6[%c0, %c0_0] : memref<1x2448xf32, #tpu.memory_space<vmem>>, vector<1x128xf32>
    %c0_1 = arith.constant 0 : index
    %c128 = arith.constant 128 : index
    %1 = vector.load %arg6[%c0_1, %c128] : memref<1x2448xf32, #tpu.memory_space<vmem>>, vector<1x256xf32>
    %c0_2 = arith.constant 0 : index
    %c384 = arith.constant 384 : index
    %2 = vector.load %arg6[%c0_2, %c384] : memref<1x2448xf32, #tpu.memory_space<vmem>>, vector<1x256xf32>
    %c0_3 = arith.constant 0 : index
    %c640 = arith.constant 640 : index
    %3 = vector.load %arg6[%c0_3, %c640] : memref<1x2448xf32, #tpu.memory_space<vmem>>, vector<1x512xf32>
    %c0_4 = arith.constant 0 : index
    %c1152 = arith.constant 1152 : index
    %4 = vector.load %arg6[%c0_4, %c1152] : memref<1x2448xf32, #tpu.memory_space<vmem>>, vector<1x512xf32>
    %c0_5 = arith.constant 0 : index
    %c1664 = arith.constant 1664 : index
    %5 = vector.load %arg6[%c0_5, %c1664] : memref<1x2448xf32, #tpu.memory_space<vmem>>, vector<1x784xf32>
    %cst = arith.constant 0.000000e+00 : f32
    %6 = vector.broadcast %cst : f32 to vector<32x128xf32>
    %c0_6 = arith.constant 0 : index
    %c0_7 = arith.constant 0 : index
    %7 = vector.load %arg8[%c0_6, %c0_7] : memref<32x128xf32, #tpu.memory_space<vmem>>, vector<32x128xf32>
    tpu.vector_store %arg8[%c0_6, %c0_7], %6 {strides = array<i32>} : memref<32x128xf32, #tpu.memory_space<vmem>>, vector<32x128xf32>,
    %c0_8 = arith.constant 0 : index
    %c0_9 = arith.constant 0 : index
    %c0_10 = arith.constant 0 : index
    %8 = vector.load %arg1[%c0_8, %c0_9, %c0_10] : memref<1x32x100xf32, #tpu.memory_space<vmem>>, vector<1x32x100xf32>
    %9 = vector.shape_cast %8 : vector<1x32x100xf32> to vector<32x100xf32>
    %c0_11 = arith.constant 0 : index
    %c0_12 = arith.constant 0 : index
    %10 = vector.load %arg8[%c0_11, %c0_12] : memref<32x128xf32, #tpu.memory_space<vmem>>, vector<32x100xf32>
    tpu.vector_store %arg8[%c0_11, %c0_12], %9 {strides = array<i32>} : memref<32x128xf32, #tpu.memory_space<vmem>>, vector<32x100xf32>,
    %c0_13 = arith.constant 0 : index
    %c0_14 = arith.constant 0 : index
    %11 = vector.load %arg8[%c0_13, %c0_14] : memref<32x128xf32, #tpu.memory_space<vmem>>, vector<32x128xf32>
    %c0_15 = arith.constant 0 : index
    %c0_16 = arith.constant 0 : index
    %12 = vector.load %arg2[%c0_15, %c0_16] : memref<128x128xbf16, #tpu.memory_space<vmem>>, vector<128x128xbf16>
    %13 = arith.truncf %11 : vector<32x128xf32> to vector<32x128xbf16>
    %cst_17 = arith.constant dense<0.000000e+00> : vector<32x128xf32>
    %14 = tpu.matmul %13, %12, %cst_17 {dimension_numbers = #tpu.dot_dimension_numbers<[1], [0], [0], [1], [0, 0, 1, 1], [], []>} : vector<32x128xbf16>, vector<128x128xbf16>, vector<32x128xf32> -> vector<32x128xf32>
    %15 = vector.broadcast %0 : vector<1x128xf32> to vector<32x128xf32>
    %16 = arith.addf %14, %15 : vector<32x128xf32>
    %cst_18 = arith.constant 0.000000e+00 : f32
    %17 = vector.broadcast %cst_18 : f32 to vector<32x128xf32>
    %18 = arith.cmpf ogt, %16, %17 : vector<32x128xf32>
    %cst_19 = arith.constant 2.000000e-01 : f32
    %19 = vector.broadcast %cst_19 : f32 to vector<32x128xf32>
    %20 = arith.mulf %19, %16 : vector<32x128xf32>
    %21 = arith.select %18, %16, %20 : vector<32x128xi1>, vector<32x128xf32>
    %c0_20 = arith.constant 0 : index
    %c0_21 = arith.constant 0 : index
    %22 = vector.load %arg3[%c0_20, %c0_21] : memref<128x256xbf16, #tpu.memory_space<vmem>>, vector<128x256xbf16>
    %23 = arith.truncf %21 : vector<32x128xf32> to vector<32x128xbf16>
    %cst_22 = arith.constant dense<0.000000e+00> : vector<32x256xf32>
    %24 = tpu.matmul %23, %22, %cst_22 {dimension_numbers = #tpu.dot_dimension_numbers<[1], [0], [0], [1], [0, 0, 1, 1], [], []>} : vector<32x128xbf16>, vector<128x256xbf16>, vector<32x256xf32> -> vector<32x256xf32>
    %cst_23 = arith.constant dense<0.000000e+00> : vector<256xf32>
    %25 = vector.multi_reduction <add>, %24, %cst_23 [0] : vector<32x256xf32> to vector<256xf32>
    %26 = vector.shape_cast %25 : vector<256xf32> to vector<1x256xf32>
    %27 = arith.mulf %24, %24 : vector<32x256xf32>
    %cst_24 = arith.constant dense<0.000000e+00> : vector<256xf32>
    %28 = vector.multi_reduction <add>, %27, %cst_24 [0] : vector<32x256xf32> to vector<256xf32>
    %29 = vector.shape_cast %28 : vector<256xf32> to vector<1x256xf32>
    %cst_25 = arith.constant 3.125000e-02 : f32
    %30 = vector.broadcast %cst_25 : f32 to vector<1x256xf32>
    %31 = arith.mulf %26, %30 : vector<1x256xf32>
    %cst_26 = arith.constant 3.125000e-02 : f32
    %32 = vector.broadcast %cst_26 : f32 to vector<1x256xf32>
    %33 = arith.mulf %29, %32 : vector<1x256xf32>
    %34 = arith.mulf %31, %31 : vector<1x256xf32>
    %35 = arith.subf %33, %34 : vector<1x256xf32>
    %cst_27 = arith.constant 0.000000e+00 : f32
    %36 = vector.broadcast %cst_27 : f32 to vector<1x256xf32>
    %37 = arith.maximumf %35, %36 : vector<1x256xf32>
    %cst_28 = arith.constant 9.99999974E-6 : f32
    %38 = vector.broadcast %cst_28 : f32 to vector<1x256xf32>
    %39 = arith.addf %37, %38 : vector<1x256xf32>
    %40 = math.rsqrt %39 : vector<1x256xf32>
    %41 = arith.mulf %40, %1 : vector<1x256xf32>
    %42 = arith.mulf %31, %41 : vector<1x256xf32>
    %43 = arith.subf %2, %42 : vector<1x256xf32>
    %44 = vector.broadcast %41 : vector<1x256xf32> to vector<32x256xf32>
    %45 = arith.mulf %24, %44 : vector<32x256xf32>
    %46 = vector.broadcast %43 : vector<1x256xf32> to vector<32x256xf32>
    %47 = arith.addf %45, %46 : vector<32x256xf32>
    %cst_29 = arith.constant 0.000000e+00 : f32
    %48 = vector.broadcast %cst_29 : f32 to vector<32x256xf32>
    %49 = arith.cmpf ogt, %47, %48 : vector<32x256xf32>
    %cst_30 = arith.constant 2.000000e-01 : f32
    %50 = vector.broadcast %cst_30 : f32 to vector<32x256xf32>
    %51 = arith.mulf %50, %47 : vector<32x256xf32>
    %52 = arith.select %49, %47, %51 : vector<32x256xi1>, vector<32x256xf32>
    %c0_31 = arith.constant 0 : index
    %c0_32 = arith.constant 0 : index
    %53 = vector.load %arg4[%c0_31, %c0_32] : memref<256x512xbf16, #tpu.memory_space<vmem>>, vector<256x512xbf16>
    %54 = arith.truncf %52 : vector<32x256xf32> to vector<32x256xbf16>
    %cst_33 = arith.constant dense<0.000000e+00> : vector<32x512xf32>
    %55 = tpu.matmul %54, %53, %cst_33 {dimension_numbers = #tpu.dot_dimension_numbers<[1], [0], [0], [1], [0, 0, 1, 1], [], []>} : vector<32x256xbf16>, vector<256x512xbf16>, vector<32x512xf32> -> vector<32x512xf32>
    %cst_34 = arith.constant dense<0.000000e+00> : vector<512xf32>
    %56 = vector.multi_reduction <add>, %55, %cst_34 [0] : vector<32x512xf32> to vector<512xf32>
    %57 = vector.shape_cast %56 : vector<512xf32> to vector<1x512xf32>
    %58 = arith.mulf %55, %55 : vector<32x512xf32>
    %cst_35 = arith.constant dense<0.000000e+00> : vector<512xf32>
    %59 = vector.multi_reduction <add>, %58, %cst_35 [0] : vector<32x512xf32> to vector<512xf32>
    %60 = vector.shape_cast %59 : vector<512xf32> to vector<1x512xf32>
    %cst_36 = arith.constant 3.125000e-02 : f32
    %61 = vector.broadcast %cst_36 : f32 to vector<1x512xf32>
    %62 = arith.mulf %57, %61 : vector<1x512xf32>
    %cst_37 = arith.constant 3.125000e-02 : f32
    %63 = vector.broadcast %cst_37 : f32 to vector<1x512xf32>
    %64 = arith.mulf %60, %63 : vector<1x512xf32>
    %65 = arith.mulf %62, %62 : vector<1x512xf32>
    %66 = arith.subf %64, %65 : vector<1x512xf32>
    %cst_38 = arith.constant 0.000000e+00 : f32
    %67 = vector.broadcast %cst_38 : f32 to vector<1x512xf32>
    %68 = arith.maximumf %66, %67 : vector<1x512xf32>
    %cst_39 = arith.constant 9.99999974E-6 : f32
    %69 = vector.broadcast %cst_39 : f32 to vector<1x512xf32>
    %70 = arith.addf %68, %69 : vector<1x512xf32>
    %71 = math.rsqrt %70 : vector<1x512xf32>
    %72 = arith.mulf %71, %3 : vector<1x512xf32>
    %73 = arith.mulf %62, %72 : vector<1x512xf32>
    %74 = arith.subf %4, %73 : vector<1x512xf32>
    %75 = vector.broadcast %72 : vector<1x512xf32> to vector<32x512xf32>
    %76 = arith.mulf %55, %75 : vector<32x512xf32>
    %77 = vector.broadcast %74 : vector<1x512xf32> to vector<32x512xf32>
    %78 = arith.addf %76, %77 : vector<32x512xf32>
    %cst_40 = arith.constant 0.000000e+00 : f32
    %79 = vector.broadcast %cst_40 : f32 to vector<32x512xf32>
    %80 = arith.cmpf ogt, %78, %79 : vector<32x512xf32>
    %cst_41 = arith.constant 2.000000e-01 : f32
    %81 = vector.broadcast %cst_41 : f32 to vector<32x512xf32>
    %82 = arith.mulf %81, %78 : vector<32x512xf32>
    %83 = arith.select %80, %78, %82 : vector<32x512xi1>, vector<32x512xf32>
    %c0_42 = arith.constant 0 : index
    %c0_43 = arith.constant 0 : index
    %84 = vector.load %arg5[%c0_42, %c0_43] : memref<512x784xbf16, #tpu.memory_space<vmem>>, vector<512x784xbf16>
    %85 = arith.truncf %83 : vector<32x512xf32> to vector<32x512xbf16>
    %cst_44 = arith.constant dense<0.000000e+00> : vector<32x784xf32>
    %86 = tpu.matmul %85, %84, %cst_44 {dimension_numbers = #tpu.dot_dimension_numbers<[1], [0], [0], [1], [0, 0, 1, 1], [], []>} : vector<32x512xbf16>, vector<512x784xbf16>, vector<32x784xf32> -> vector<32x784xf32>
    %87 = vector.broadcast %5 : vector<1x784xf32> to vector<32x784xf32>
    %88 = arith.addf %86, %87 : vector<32x784xf32>
    %89 = math.tanh %88 : vector<32x784xf32>
    %c0_45 = arith.constant 0 : index
    %c0_46 = arith.constant 0 : index
    %c0_47 = arith.constant 0 : index
    %90 = vector.load %arg7[%c0_45, %c0_46, %c0_47] : memref<1x32x784xf32, #tpu.memory_space<vmem>>, vector<1x32x784xf32>
    %91 = vector.shape_cast %90 : vector<1x32x784xf32> to vector<32x784xf32>
    %92 = vector.shape_cast %89 : vector<32x784xf32> to vector<1x32x784xf32>
    tpu.vector_store %arg7[%c0_45, %c0_46, %c0_47], %92 {strides = array<i32>} : memref<1x32x784xf32, #tpu.memory_space<vmem>>, vector<1x32x784xf32>,
    return
  }
  func.func @transform_0(%arg0: i32) -> (i32, i32, i32) {
    %c0_i32 = arith.constant 0 : i32
    %c0_i32_0 = arith.constant 0 : i32
    %c0_i32_1 = arith.constant 0 : i32
    return %arg0, %c0_i32, %c0_i32_0 : i32, i32, i32
  }
  func.func @transform_1(%arg0: i32) -> (i32, i32) {
    %c0_i32 = arith.constant 0 : i32
    %c0_i32_0 = arith.constant 0 : i32
    %c0_i32_1 = arith.constant 0 : i32
    return %c0_i32, %c0_i32_0 : i32, i32
  }
  func.func @transform_2(%arg0: i32) -> (i32, i32) {
    %c0_i32 = arith.constant 0 : i32
    %c0_i32_0 = arith.constant 0 : i32
    %c0_i32_1 = arith.constant 0 : i32
    return %c0_i32, %c0_i32_0 : i32, i32
  }
  func.func @transform_3(%arg0: i32) -> (i32, i32) {
    %c0_i32 = arith.constant 0 : i32
    %c0_i32_0 = arith.constant 0 : i32
    %c0_i32_1 = arith.constant 0 : i32
    return %c0_i32, %c0_i32_0 : i32, i32
  }
  func.func @transform_4(%arg0: i32) -> (i32, i32) {
    %c0_i32 = arith.constant 0 : i32
    %c0_i32_0 = arith.constant 0 : i32
    %c0_i32_1 = arith.constant 0 : i32
    return %c0_i32, %c0_i32_0 : i32, i32
  }
  func.func @transform_5(%arg0: i32) -> (i32, i32) {
    %c0_i32 = arith.constant 0 : i32
    %c0_i32_0 = arith.constant 0 : i32
    %c0_i32_1 = arith.constant 0 : i32
    return %c0_i32, %c0_i32_0 : i32, i32
  }
  func.func @transform_6(%arg0: i32) -> (i32, i32, i32) {
    %c0_i32 = arith.constant 0 : i32
    %c0_i32_0 = arith.constant 0 : i32
    %c0_i32_1 = arith.constant 0 : i32
    return %arg0, %c0_i32, %c0_i32_0 : i32, i32, i32
  }
}

</mosaic_0001>

<llo_original>
// kernel: tpu_custom_call.1
$region0: #{tpu_custom_call.1}
  #allocation0 [shape = 'u32[]', space=smem, size = 0x4, offset = 0x4, fixed_abs, tag = 'smem constant byte address 0x4 - core index']
  #allocation1 [shape = 'u32[144,128]{1,0:T(1,128)}', space=vmem, size = 0x12000, scoped, tag = 'internal scratch']
  #allocation2 [shape = 'f32[32,128]{1,0:T(8,128)}', space=vmem, size = 0x4000, scoped, tag = 'scratch operand']
  %s0 = inlined_call_operand.vmem [shape: f32[2,32,100], index: 0, kind: input, shape index: {}]
  %s1 = inlined_call_operand.vmem [shape: bf16[128,128], index: 1, kind: input, shape index: {}]
  %s2 = inlined_call_operand.vmem [shape: bf16[128,256], index: 2, kind: input, shape index: {}]
  %s3 = inlined_call_operand.vmem [shape: bf16[256,512], index: 3, kind: input, shape index: {}]
  %s4 = inlined_call_operand.vmem [shape: bf16[512,784], index: 4, kind: input, shape index: {}]
  %s5 = inlined_call_operand.vmem [shape: f32[1,2448], index: 5, kind: input, shape index: {}]
  %s6 = inlined_call_operand.hbm [shape: f32[2,32,784], index: 6, kind: output, shape index: {}]
  %s7 = sld [smem:[#allocation0]]
  $region57: #{tpu_custom_call.1} parent=0
    _
  %s9 = ssub.s32 1, %s7
  %s10 = scalar_select 0, %s9, %s7
  $region1: #{tpu_custom_call.1} parent=0
    #allocation3 [shape = 'u8[229376]{0}', space=vmem, size = 0x38000, scoped, tag = 'output window, operand 0']
    #allocation4 [shape = 's32[2]{0}', space=sflag, size = 0x8, scoped, tag = 'scoped memory for tpu_custom_call.1']
    %11 = vsyncpa [#allocation4], 0
    %s12 = scalar_lea.sflag [#allocation4], 1
    %13 = vsyncpa %s12, 0
    loop: start=0, step=1, limit=4
    $region2: #{tpu_custom_call.1} parent=1 // loop_pre_header
      _
    $region3: #{tpu_custom_call.1} parent=1 // loop_header
      %s15 = sphi 0, %s19
      %p16 = scmp.ge.s32.totalorder %s15, 4
      %s25 = sphi 0, %s27
      %s28 = sphi 0, %s25
      %s29 = sphi 0, %s28
      %s45 = sphi 0, %s29
      %s49 = sphi 0, %s49
      %s51 = sphi 0, %s49
      %s52 = sphi 0, %s51
      %s66 = sphi 0, %s52
      %s70 = sphi 0, %s70
      %s72 = sphi 0, %s70
      %s73 = sphi 0, %s72
      %s87 = sphi 0, %s73
      %s91 = sphi 0, %s91
      %s93 = sphi 0, %s91
      %s94 = sphi 0, %s93
      %s108 = sphi 0, %s94
      %s112 = sphi 0, %s112
      %s114 = sphi 0, %s112
      %s115 = sphi 0, %s114
      %s129 = sphi 0, %s115
      %s133 = sphi 0, %s133
      %s135 = sphi 0, %s133
      %s136 = sphi 0, %s135
      %s150 = sphi 0, %s136
      %s156 = sphi 0, %s158
      %s159 = sphi 0, %s156
      %s160 = sphi 0, %s159
      %s176 = sphi 0, %s160
    $region4: #{tpu_custom_call.1} parent=1 // loop_header_branch
      %18 = sbr.rel (%p16) target = $region8
    $region5: #{tpu_custom_call.1} parent=1 // loop_body
      %s20 = ssub.s32 %s15, 1
      %s21 = ssub.s32 %s15, 2
      %s22 = sadd.s32 %s15, 1
      %s23 = ssub.s32 %s15, %s22
      %p24 = scmp.eq.s32.totalorder %s23, 0
      %s26 = sadd.s32 %s25, 1
      %s27 = scalar_select %p24, %s25, %s26
      %p30 = pneg %p24
      %p31 = scmp.eq.s32.totalorder %s15, 1
      %p32 = por %p30, %p31
      %p33 = scmp.ne.s32.totalorder %s25, %s28
      %p34 = scmp.eq.s32.totalorder %s15, 0
      %p35 = por %p33, %p34
      %p36 = scmp.ne.s32.totalorder %s25, %s28
      %p37 = scmp.eq.s32.totalorder %s20, 1
      %p38 = por %p36, %p37
      %p39 = scmp.ne.s32.totalorder %s28, %s29
      %p40 = scmp.eq.s32.totalorder %s20, 0
      %p41 = por %p39, %p40
      %p42 = scmp.ne.s32.totalorder %s28, %s29
      %p43 = scmp.eq.s32.totalorder %s21, 1
      %p44 = por %p42, %p43
      %p46 = scmp.ne.s32.totalorder %s29, %s45
      %p47 = scmp.eq.s32.totalorder %s21, 0
      %p48 = por %p46, %p47
      %s50 = sadd.s32 %s49, 1
      %p53 = scmp.eq.s32.totalorder %s15, 1
      %p54 = scmp.ne.s32.totalorder %s49, %s51
      %p55 = scmp.eq.s32.totalorder %s15, 0
      %p56 = por %p54, %p55
      %p57 = scmp.ne.s32.totalorder %s49, %s51
      %p58 = scmp.eq.s32.totalorder %s20, 1
      %p59 = por %p57, %p58
      %p60 = scmp.ne.s32.totalorder %s51, %s52
      %p61 = scmp.eq.s32.totalorder %s20, 0
      %p62 = por %p60, %p61
      %p63 = scmp.ne.s32.totalorder %s51, %s52
      %p64 = scmp.eq.s32.totalorder %s21, 1
      %p65 = por %p63, %p64
      %p67 = scmp.ne.s32.totalorder %s52, %s66
      %p68 = scmp.eq.s32.totalorder %s21, 0
      %p69 = por %p67, %p68
      %s71 = sadd.s32 %s70, 1
      %p74 = scmp.eq.s32.totalorder %s15, 1
      %p75 = scmp.ne.s32.totalorder %s70, %s72
      %p76 = scmp.eq.s32.totalorder %s15, 0
      %p77 = por %p75, %p76
      %p78 = scmp.ne.s32.totalorder %s70, %s72
      %p79 = scmp.eq.s32.totalorder %s20, 1
      %p80 = por %p78, %p79
      %p81 = scmp.ne.s32.totalorder %s72, %s73
      %p82 = scmp.eq.s32.totalorder %s20, 0
      %p83 = por %p81, %p82
      %p84 = scmp.ne.s32.totalorder %s72, %s73
      %p85 = scmp.eq.s32.totalorder %s21, 1
      %p86 = por %p84, %p85
      %p88 = scmp.ne.s32.totalorder %s73, %s87
      %p89 = scmp.eq.s32.totalorder %s21, 0
      %p90 = por %p88, %p89
      %s92 = sadd.s32 %s91, 1
      %p95 = scmp.eq.s32.totalorder %s15, 1
      %p96 = scmp.ne.s32.totalorder %s91, %s93
      %p97 = scmp.eq.s32.totalorder %s15, 0
      %p98 = por %p96, %p97
      %p99 = scmp.ne.s32.totalorder %s91, %s93
      %p100 = scmp.eq.s32.totalorder %s20, 1
      %p101 = por %p99, %p100
      %p102 = scmp.ne.s32.totalorder %s93, %s94
      %p103 = scmp.eq.s32.totalorder %s20, 0
      %p104 = por %p102, %p103
      %p105 = scmp.ne.s32.totalorder %s93, %s94
      %p106 = scmp.eq.s32.totalorder %s21, 1
      %p107 = por %p105, %p106
      %p109 = scmp.ne.s32.totalorder %s94, %s108
      %p110 = scmp.eq.s32.totalorder %s21, 0
      %p111 = por %p109, %p110
      %s113 = sadd.s32 %s112, 1
      %p116 = scmp.eq.s32.totalorder %s15, 1
      %p117 = scmp.ne.s32.totalorder %s112, %s114
      %p118 = scmp.eq.s32.totalorder %s15, 0
      %p119 = por %p117, %p118
      %p120 = scmp.ne.s32.totalorder %s112, %s114
      %p121 = scmp.eq.s32.totalorder %s20, 1
      %p122 = por %p120, %p121
      %p123 = scmp.ne.s32.totalorder %s114, %s115
      %p124 = scmp.eq.s32.totalorder %s20, 0
      %p125 = por %p123, %p124
      %p126 = scmp.ne.s32.totalorder %s114, %s115
      %p127 = scmp.eq.s32.totalorder %s21, 1
      %p128 = por %p126, %p127
      %p130 = scmp.ne.s32.totalorder %s115, %s129
      %p131 = scmp.eq.s32.totalorder %s21, 0
      %p132 = por %p130, %p131
      %s134 = sadd.s32 %s133, 1
      %p137 = scmp.eq.s32.totalorder %s15, 1
      %p138 = scmp.ne.s32.totalorder %s133, %s135
      %p139 = scmp.eq.s32.totalorder %s15, 0
      %p140 = por %p138, %p139
      %p141 = scmp.ne.s32.totalorder %s133, %s135
      %p142 = scmp.eq.s32.totalorder %s20, 1
      %p143 = por %p141, %p142
      %p144 = scmp.ne.s32.totalorder %s135, %s136
      %p145 = scmp.eq.s32.totalorder %s20, 0
      %p146 = por %p144, %p145
      %p147 = scmp.ne.s32.totalorder %s135, %s136
      %p148 = scmp.eq.s32.totalorder %s21, 1
      %p149 = por %p147, %p148
      %p151 = scmp.ne.s32.totalorder %s136, %s150
      %p152 = scmp.eq.s32.totalorder %s21, 0
      %p153 = por %p151, %p152
      %s154 = ssub.s32 %s15, %s22
      %p155 = scmp.eq.s32.totalorder %s154, 0
      %s157 = sadd.s32 %s156, 1
      %s158 = scalar_select %p155, %s156, %s157
      %p161 = pneg %p155
      %p162 = scmp.eq.s32.totalorder %s15, 1
      %p163 = por %p161, %p162
      %p164 = scmp.ne.s32.totalorder %s156, %s159
      %p165 = scmp.eq.s32.totalorder %s15, 0
      %p166 = por %p164, %p165
      %p167 = scmp.ne.s32.totalorder %s156, %s159
      %p168 = scmp.eq.s32.totalorder %s20, 1
      %p169 = por %p167, %p168
      %p170 = scmp.ne.s32.totalorder %s159, %s160
      %p171 = scmp.eq.s32.totalorder %s20, 0
      %p172 = por %p170, %p171
      %p173 = scmp.ne.s32.totalorder %s159, %s160
      %p174 = scmp.eq.s32.totalorder %s21, 1
      %p175 = por %p173, %p174
      %p177 = scmp.ne.s32.totalorder %s160, %s176
      %p178 = scmp.eq.s32.totalorder %s21, 0
      %p179 = por %p177, %p178
      %p180 = scmp.le.s32.totalorder 1, %s15
      %p181 = scmp.lt.s32.totalorder %s15, 3
      %p182 = pnand %p180, %p181
      %p183 = pneg %p182
      // Predicated region
      $region9: #{tpu_custom_call.1} parent=5 // pred_check
        _
      $region10: #{tpu_custom_call.1} parent=5 // pred_check_branch
        %185 = sbr.rel (%p182) target = $region12
      $region11: #{tpu_custom_call.1} parent=5 // pred_region
        %s186 = ssub.s32 %s15, 1
        // Predicated region
        $region13: #{tpu_custom_call.1} parent=11 // pred_check
          %p187 = pneg %p62
        $region14: #{tpu_custom_call.1} parent=11 // pred_check_branch
          %189 = sbr.rel (%p187) target = $region16
        $region15: #{tpu_custom_call.1} parent=11 // pred_region
          _
        $region16: #{tpu_custom_call.1} parent=11 // pred_fallthru
          _
        // Predicated region
        $region17: #{tpu_custom_call.1} parent=11 // pred_check
          %p190 = pneg %p83
        $region18: #{tpu_custom_call.1} parent=11 // pred_check_branch
          %192 = sbr.rel (%p190) target = $region20
        $region19: #{tpu_custom_call.1} parent=11 // pred_region
          _
        $region20: #{tpu_custom_call.1} parent=11 // pred_fallthru
          _
        // Predicated region
        $region21: #{tpu_custom_call.1} parent=11 // pred_check
          %p193 = pneg %p104
        $region22: #{tpu_custom_call.1} parent=11 // pred_check_branch
          %195 = sbr.rel (%p193) target = $region24
        $region23: #{tpu_custom_call.1} parent=11 // pred_region
          _
        $region24: #{tpu_custom_call.1} parent=11 // pred_fallthru
          _
        // Predicated region
        $region25: #{tpu_custom_call.1} parent=11 // pred_check
          %p196 = pneg %p125
        $region26: #{tpu_custom_call.1} parent=11 // pred_check_branch
          %198 = sbr.rel (%p196) target = $region28
        $region27: #{tpu_custom_call.1} parent=11 // pred_region
          _
        $region28: #{tpu_custom_call.1} parent=11 // pred_fallthru
          _
        // Predicated region
        $region29: #{tpu_custom_call.1} parent=11 // pred_check
          %p199 = pneg %p146
        $region30: #{tpu_custom_call.1} parent=11 // pred_check_branch
          %201 = sbr.rel (%p199) target = $region32
        $region31: #{tpu_custom_call.1} parent=11 // pred_region
          _
        $region32: #{tpu_custom_call.1} parent=11 // pred_fallthru
          _
      $region12: #{tpu_custom_call.1} parent=5 // pred_fallthru
        _
      %p202 = scmp.lt.s32.totalorder %s15, 2
      // Predicated region
      $region33: #{tpu_custom_call.1} parent=5 // pred_check
        %p203 = pneg %p202
      $region34: #{tpu_custom_call.1} parent=5 // pred_check_branch
        %205 = sbr.rel (%p203) target = $region36
      $region35: #{tpu_custom_call.1} parent=5 // pred_region
        // Predicated region
        $region37: #{tpu_custom_call.1} parent=35 // pred_check
          %p206 = pneg %p35
        $region38: #{tpu_custom_call.1} parent=35 // pred_check_branch
          %208 = sbr.rel (%p206) target = $region40
        $region39: #{tpu_custom_call.1} parent=35 // pred_region
          %p209 = scmp.lt.s32.totalorder %s15, 1
          %s210 = scalar_select %p209, %s15, 1
          %s211 = smul.addr %s210, 4
          %s212 = smul.addr %s211, 8
          %s213 = scalar_lea.vmem %s0, %s212
        $region40: #{tpu_custom_call.1} parent=35 // pred_fallthru
          _
      $region36: #{tpu_custom_call.1} parent=5 // pred_fallthru
        _
      %p214 = scmp.le.s32.totalorder 1, %s15
      %p215 = scmp.lt.s32.totalorder %s15, 3
      %p216 = pnand %p214, %p215
      %p217 = pneg %p216
      // Predicated region
      $region41: #{tpu_custom_call.1} parent=5 // pred_check
        _
      $region42: #{tpu_custom_call.1} parent=5 // pred_check_branch
        %219 = sbr.rel (%p216) target = $region44
      $region43: #{tpu_custom_call.1} parent=5 // pred_region
        %s220 = ssub.s32 %s15, 1
        %p221 = scmp.lt.s32.totalorder %s20, 1
        %s222 = scalar_select %p221, %s20, 1
        %s223 = smul.addr %s222, 4
        %s224 = smul.addr %s223, 8
        %s225 = scalar_lea.vmem %s0, %s224
        %p226 = pneg %p41
        %p227 = pneg %p38
        %p228 = pneg %p62
        %p229 = pneg %p59
        %p230 = pneg %p83
        %p231 = pneg %p80
        %p232 = pneg %p104
        %p233 = pneg %p101
        %p234 = pneg %p125
        %p235 = pneg %p122
        %p236 = pneg %p146
        %p237 = pneg %p143
        %p238 = pneg %p172
        %p239 = pneg %p169
        %s240 = sand.u32 %s159, 1
        %s241 = scalar_lea.sflag [#allocation4], %s240
        %s242 = sand.u32 %s159, 1
        %s243 = smul.addr %s242, 224
        %s244 = scalar_lea.vmem [#allocation3], %s243
        %p245 = scmp.lt.s32.totalorder %s20, 1
        %s246 = scalar_select %p245, %s20, 1
        %s247 = smul.addr %s246, 4
        %s248 = smul.addr %s247, 8
        %s249 = scalar_lea.vmem %s0, %s248
        %v251 = vld [vmem:[%s5] sm:$0x1]
        %v252 = vld [vmem:[%s5 + $0x1] sm:$0x3]
        %v253 = vld [vmem:[%s5 + $0x3] sm:$0x3]
        %v254 = vld [vmem:[%s5 + $0x5] sm:$0xf]
        %v255 = vld [vmem:[%s5 + $0x9] sm:$0xf]
        %v256 = vld [vmem:[%s5 + $0xd] sm:$0x7f]
        %257 = vst [vmem:[#allocation2] sm:$0xff] 0.0
        %258 = vst [vmem:[#allocation2 + $0x8] sm:$0xff] 0.0
        %259 = vst [vmem:[#allocation2 + $0x10] sm:$0xff] 0.0
        %260 = vst [vmem:[#allocation2 + $0x18] sm:$0xff] 0.0
        %v261 = vld [vmem:[%s249] sm:$0xff]
        %v262 = vld [vmem:[%s249 + $0x8] sm:$0xff]
        %v263 = vld [vmem:[%s249 + $0x10] sm:$0xff]
        %v264 = vld [vmem:[%s249 + $0x18] sm:$0xff]
        %vm265 = vcmask 818176
        %266 = vst.msk [vmem:[#allocation2] sm:$0xff] %vm265, %v261
        %267 = vst.msk [vmem:[#allocation2 + $0x8] sm:$0xff] %vm265, %v262
        %268 = vst.msk [vmem:[#allocation2 + $0x10] sm:$0xff] %vm265, %v263
        %269 = vst.msk [vmem:[#allocation2 + $0x18] sm:$0xff] %vm265, %v264
        %v270 = vld [vmem:[#allocation2] sm:$0xff]
        %v271 = vld [vmem:[#allocation2 + $0x8] sm:$0xff]
        %v272 = vld [vmem:[#allocation2 + $0x10] sm:$0xff]
        %v273 = vld [vmem:[#allocation2 + $0x18] sm:$0xff]
        %v274 = vld [vmem:[%s1] sm:$0xf]
        %v275 = vld [vmem:[%s1 + $0x4] sm:$0xf]
        %v276 = vld [vmem:[%s1 + $0x8] sm:$0xf]
        %v277 = vld [vmem:[%s1 + $0xc] sm:$0xf]
        %v278 = vld [vmem:[%s1 + $0x10] sm:$0xf]
        %v279 = vld [vmem:[%s1 + $0x14] sm:$0xf]
        %v280 = vld [vmem:[%s1 + $0x18] sm:$0xf]
        %v281 = vld [vmem:[%s1 + $0x1c] sm:$0xf]
        %v282 = vld [vmem:[%s1 + $0x20] sm:$0xf]
        %v283 = vld [vmem:[%s1 + $0x24] sm:$0xf]
        %v284 = vld [vmem:[%s1 + $0x28] sm:$0xf]
        %v285 = vld [vmem:[%s1 + $0x2c] sm:$0xf]
        %v286 = vld [vmem:[%s1 + $0x30] sm:$0xf]
        %v287 = vld [vmem:[%s1 + $0x34] sm:$0xf]
        %v288 = vld [vmem:[%s1 + $0x38] sm:$0xf]
        %v289 = vld [vmem:[%s1 + $0x3c] sm:$0xf]
        %v290 = vpack.c.bf16 %v271, %v270
        %v291 = vpack.c.bf16 %v273, %v272
        %v293 = vlaneseq
        %v294 = vshrl.u32 %v293, 7
        %v295 = vsub.s32 0, %v294
        %v296 = vrot.slane %v251, %v295
        %v314 = vunpack.c.l.b16 %v274
        %v315 = vunpack.c.l.b16 %v275
        %v316 = vunpack.c.l.b16 %v276
        %v317 = vunpack.c.l.b16 %v277
        %v318 = vunpack.c.l.b16 %v278
        %v319 = vunpack.c.l.b16 %v279
        %v320 = vunpack.c.l.b16 %v280
        %v321 = vunpack.c.l.b16 %v281
        %v322 = vunpack.c.l.b16 %v282
        %v323 = vunpack.c.l.b16 %v283
        %v324 = vunpack.c.l.b16 %v284
        %v325 = vunpack.c.l.b16 %v285
        %v326 = vunpack.c.l.b16 %v286
        %v327 = vunpack.c.l.b16 %v287
        %v328 = vunpack.c.l.b16 %v288
        %v329 = vunpack.c.l.b16 %v289
        %v330 = vpack.c.b16 %v315, %v314
        %v331 = vpack.c.b16 %v317, %v316
        %v332 = vpack.c.b16 %v319, %v318
        %v333 = vpack.c.b16 %v321, %v320
        %v334 = vpack.c.b16 %v323, %v322
        %v335 = vpack.c.b16 %v325, %v324
        %v336 = vpack.c.b16 %v327, %v326
        %v337 = vpack.c.b16 %v329, %v328
        %346 = vmatprep.subr.bf16.mxu0 0
        %347 = vmatpush1.bf16.msra.mxu0 %v330
        %348 = vmatprep.subr.bf16.mxu0 0
        %349 = vmatpush1.bf16.msra.mxu0 %v331
        %350 = vmatprep.subr.bf16.mxu0 0
        %351 = vmatpush1.bf16.msra.mxu0 %v332
        %352 = vmatprep.subr.bf16.mxu0 0
        %353 = vmatpush1.bf16.msra.mxu0 %v333
        %354 = vmatprep.subr.bf16.mxu0 0
        %355 = vmatpush1.bf16.msra.mxu0 %v334
        %356 = vmatprep.subr.bf16.mxu0 0
        %357 = vmatpush1.bf16.msra.mxu0 %v335
        %358 = vmatprep.subr.bf16.mxu0 0
        %359 = vmatpush1.bf16.msra.mxu0 %v336
        %360 = vmatprep.subr.bf16.mxu0 0
        %361 = vmatpush1.bf16.msra.mxu0 %v337
        %362 = vmatprep.subr.bf16.mxu0 0
        %363 = vmatpush1.bf16.msra.mxu0 0
        %364 = vmatprep.subr.bf16.mxu0 0
        %365 = vmatpush1.bf16.msra.mxu0 0
        %366 = vmatprep.subr.bf16.mxu0 0
        %367 = vmatpush1.bf16.msra.mxu0 0
        %368 = vmatprep.subr.bf16.mxu0 0
        %369 = vmatpush1.bf16.msra.mxu0 0
        %370 = vmatprep.subr.bf16.mxu0 0
        %371 = vmatpush1.bf16.msra.mxu0 0
        %372 = vmatprep.subr.bf16.mxu0 0
        %373 = vmatpush1.bf16.msra.mxu0 0
        %374 = vmatprep.subr.bf16.mxu0 0
        %375 = vmatpush1.bf16.msra.mxu0 0
        %376 = vmatprep.subr.bf16.mxu0 0
        %377 = vmatpush1.bf16.msra.mxu0 0
        %378 = vmatprep.mubr.bf16.mxu0 0
        %379 = vmatmul.mubr.bf16.gmra.mrb[0].mxu0 %v290
        %v380 = vpop.f32.mrb[0].mxu0
        %v381 = vadd.f32 %v296, %v380
        %v382 = vpop.f32.mrb[0].mxu0
        %v383 = vpop.f32.mrb[0].mxu0
        %v384 = vadd.f32 %v296, %v383
        %v385 = vpop.f32.mrb[0].mxu0
        %386 = vmatprep.mubr.bf16.mxu0 0
        %387 = vmatmul.mubr.bf16.gmra.mrb[0].mxu0 %v291
        %v388 = vpop.f32.mrb[0].mxu0
        %v389 = vadd.f32 %v296, %v388
        %v390 = vpop.f32.mrb[0].mxu0
        %v391 = vpop.f32.mrb[0].mxu0
        %v392 = vadd.f32 %v296, %v391
        %v393 = vpop.f32.mrb[0].mxu0
        %394 = vdwg.mxu0
        %vm395 = vcmp.gt.f32.partialorder %v381, 0.0
        %vm396 = vcmp.gt.f32.partialorder %v384, 0.0
        %vm397 = vcmp.gt.f32.partialorder %v389, 0.0
        %vm398 = vcmp.gt.f32.partialorder %v392, 0.0
        %v399 = vmul.f32 %v381, 0.2
        %v400 = vmul.f32 %v384, 0.2
        %v401 = vmul.f32 %v389, 0.2
        %v402 = vmul.f32 %v392, 0.2
        %v403 = vsel %vm395, %v381, %v399
        %v404 = vsel %vm396, %v384, %v400
        %v405 = vsel %vm397, %v389, %v401
        %v406 = vsel %vm398, %v392, %v402
        %v407 = vld [vmem:[%s2] sm:$0xff]
        %v408 = vld [vmem:[%s2 + $0x8] sm:$0xff]
        %v409 = vld [vmem:[%s2 + $0x10] sm:$0xff]
        %v410 = vld [vmem:[%s2 + $0x18] sm:$0xff]
        %v411 = vld [vmem:[%s2 + $0x20] sm:$0xff]
        %v412 = vld [vmem:[%s2 + $0x28] sm:$0xff]
        %v413 = vld [vmem:[%s2 + $0x30] sm:$0xff]
        %v414 = vld [vmem:[%s2 + $0x38] sm:$0xff]
        %v415 = vld [vmem:[%s2 + $0x40] sm:$0xff]
        %v416 = vld [vmem:[%s2 + $0x48] sm:$0xff]
        %v417 = vld [vmem:[%s2 + $0x50] sm:$0xff]
        %v418 = vld [vmem:[%s2 + $0x58] sm:$0xff]
        %v419 = vld [vmem:[%s2 + $0x60] sm:$0xff]
        %v420 = vld [vmem:[%s2 + $0x68] sm:$0xff]
        %v421 = vld [vmem:[%s2 + $0x70] sm:$0xff]
        %v422 = vld [vmem:[%s2 + $0x78] sm:$0xff]
        %v423 = vpack.c.bf16 %v404, %v403
        %v424 = vpack.c.bf16 %v406, %v405
        %v441 = vunpack.c.l.b16 %v407
        %v442 = vunpack.c.h.b16 %v407
        %v443 = vunpack.c.l.b16 %v408
        %v444 = vunpack.c.h.b16 %v408
        %v445 = vunpack.c.l.b16 %v409
        %v446 = vunpack.c.h.b16 %v409
        %v447 = vunpack.c.l.b16 %v410
        %v448 = vunpack.c.h.b16 %v410
        %v449 = vunpack.c.l.b16 %v411
        %v450 = vunpack.c.h.b16 %v411
        %v451 = vunpack.c.l.b16 %v412
        %v452 = vunpack.c.h.b16 %v412
        %v453 = vunpack.c.l.b16 %v413
        %v454 = vunpack.c.h.b16 %v413
        %v455 = vunpack.c.l.b16 %v414
        %v456 = vunpack.c.h.b16 %v414
        %v457 = vunpack.c.l.b16 %v415
        %v458 = vunpack.c.h.b16 %v415
        %v459 = vunpack.c.l.b16 %v416
        %v460 = vunpack.c.h.b16 %v416
        %v461 = vunpack.c.l.b16 %v417
        %v462 = vunpack.c.h.b16 %v417
        %v463 = vunpack.c.l.b16 %v418
        %v464 = vunpack.c.h.b16 %v418
        %v465 = vunpack.c.l.b16 %v419
        %v466 = vunpack.c.h.b16 %v419
        %v467 = vunpack.c.l.b16 %v420
        %v468 = vunpack.c.h.b16 %v420
        %v469 = vunpack.c.l.b16 %v421
        %v470 = vunpack.c.h.b16 %v421
        %v471 = vunpack.c.l.b16 %v422
        %v472 = vunpack.c.h.b16 %v422
        %v473 = vpack.c.b16 %v443, %v441
        %v474 = vpack.c.b16 %v444, %v442
        %v475 = vpack.c.b16 %v447, %v445
        %v476 = vpack.c.b16 %v448, %v446
        %v477 = vpack.c.b16 %v451, %v449
        %v478 = vpack.c.b16 %v452, %v450
        %v479 = vpack.c.b16 %v455, %v453
        %v480 = vpack.c.b16 %v456, %v454
        %v481 = vpack.c.b16 %v459, %v457
        %v482 = vpack.c.b16 %v460, %v458
        %v483 = vpack.c.b16 %v463, %v461
        %v484 = vpack.c.b16 %v464, %v462
        %v485 = vpack.c.b16 %v467, %v465
        %v486 = vpack.c.b16 %v468, %v466
        %v487 = vpack.c.b16 %v471, %v469
        %v488 = vpack.c.b16 %v472, %v470
        %505 = vmatprep.subr.bf16.mxu0 %v474
        %506 = vmatpush1.bf16.msra.mxu0 %v473
        %507 = vmatprep.subr.bf16.mxu0 %v476
        %508 = vmatpush1.bf16.msra.mxu0 %v475
        %509 = vmatprep.subr.bf16.mxu0 %v478
        %510 = vmatpush1.bf16.msra.mxu0 %v477
        %511 = vmatprep.subr.bf16.mxu0 %v480
        %512 = vmatpush1.bf16.msra.mxu0 %v479
        %513 = vmatprep.subr.bf16.mxu0 %v482
        %514 = vmatpush1.bf16.msra.mxu0 %v481
        %515 = vmatprep.subr.bf16.mxu0 %v484
        %516 = vmatpush1.bf16.msra.mxu0 %v483
        %517 = vmatprep.subr.bf16.mxu0 %v486
        %518 = vmatpush1.bf16.msra.mxu0 %v485
        %519 = vmatprep.subr.bf16.mxu0 %v488
        %520 = vmatpush1.bf16.msra.mxu0 %v487
        %521 = vmatprep.subr.bf16.mxu0 0
        %522 = vmatpush1.bf16.msra.mxu0 0
        %523 = vmatprep.subr.bf16.mxu0 0
        %524 = vmatpush1.bf16.msra.mxu0 0
        %525 = vmatprep.subr.bf16.mxu0 0
        %526 = vmatpush1.bf16.msra.mxu0 0
        %527 = vmatprep.subr.bf16.mxu0 0
        %528 = vmatpush1.bf16.msra.mxu0 0
        %529 = vmatprep.subr.bf16.mxu0 0
        %530 = vmatpush1.bf16.msra.mxu0 0
        %531 = vmatprep.subr.bf16.mxu0 0
        %532 = vmatpush1.bf16.msra.mxu0 0
        %533 = vmatprep.subr.bf16.mxu0 0
        %534 = vmatpush1.bf16.msra.mxu0 0
        %535 = vmatprep.subr.bf16.mxu0 0
        %536 = vmatpush1.bf16.msra.mxu0 0
        %537 = vmatprep.mubr.bf16.mxu0 0
        %538 = vmatmul.mubr.bf16.gmra.mrb[0].mxu0 %v423
        %v539 = vpop.f32.mrb[0].mxu0
        %v540 = vadd.f32 0.0, %v539
        %v541 = vpop.f32.mrb[0].mxu0
        %v542 = vadd.f32 0.0, %v541
        %v543 = vpop.f32.mrb[0].mxu0
        %v544 = vadd.f32 0.0, %v543
        %v545 = vpop.f32.mrb[0].mxu0
        %v546 = vadd.f32 0.0, %v545
        %547 = vmatprep.mubr.bf16.mxu0 0
        %548 = vmatmul.mubr.bf16.gmra.mrb[0].mxu0 %v424
        %v549 = vpop.f32.mrb[0].mxu0
        %v550 = vadd.f32 0.0, %v549
        %v551 = vpop.f32.mrb[0].mxu0
        %v552 = vadd.f32 0.0, %v551
        %v553 = vpop.f32.mrb[0].mxu0
        %v554 = vadd.f32 0.0, %v553
        %v555 = vpop.f32.mrb[0].mxu0
        %v556 = vadd.f32 0.0, %v555
        %557 = vdwg.mxu0
        %v558 = vadd.f32 %v540, %v544
        %v559 = vadd.f32 %v558, %v550
        %v560 = vadd.f32 %v559, %v554
        %v561 = vrot.slane %v560, 4
        %v562 = vadd.f32 %v560, %v561
        %v563 = vrot.slane %v562, 2
        %v564 = vadd.f32 %v562, %v563
        %v565 = vrot.slane %v564, 1
        %v566 = vadd.f32 %v564, %v565
        %v567 = vadd.f32 %v542, %v546
        %v568 = vadd.f32 %v567, %v552
        %v569 = vadd.f32 %v568, %v556
        %v570 = vrot.slane %v569, 4
        %v571 = vadd.f32 %v569, %v570
        %v572 = vrot.slane %v571, 2
        %v573 = vadd.f32 %v571, %v572
        %v574 = vrot.slane %v573, 1
        %v575 = vadd.f32 %v573, %v574
        %v576 = vmul.f32 %v540, %v540
        %v577 = vmul.f32 %v542, %v542
        %v578 = vmul.f32 %v544, %v544
        %v579 = vmul.f32 %v546, %v546
        %v580 = vmul.f32 %v550, %v550
        %v581 = vmul.f32 %v552, %v552
        %v582 = vmul.f32 %v554, %v554
        %v583 = vmul.f32 %v556, %v556
        %v584 = vadd.f32 %v576, %v578
        %v585 = vadd.f32 %v584, %v580
        %v586 = vadd.f32 %v585, %v582
        %v587 = vrot.slane %v586, 4
        %v588 = vadd.f32 %v586, %v587
        %v589 = vrot.slane %v588, 2
        %v590 = vadd.f32 %v588, %v589
        %v591 = vrot.slane %v590, 1
        %v592 = vadd.f32 %v590, %v591
        %v593 = vadd.f32 %v577, %v579
        %v594 = vadd.f32 %v593, %v581
        %v595 = vadd.f32 %v594, %v583
        %v596 = vrot.slane %v595, 4
        %v597 = vadd.f32 %v595, %v596
        %v598 = vrot.slane %v597, 2
        %v599 = vadd.f32 %v597, %v598
        %v600 = vrot.slane %v599, 1
        %v601 = vadd.f32 %v599, %v600
        %v602 = vmul.f32 %v566, 0.03125
        %v603 = vmul.f32 %v575, 0.03125
        %v604 = vmul.f32 %v592, 0.03125
        %v605 = vmul.f32 %v601, 0.03125
        %v606 = vmul.f32 %v602, %v602
        %v607 = vmul.f32 %v603, %v603
        %v608 = vsub.f32 %v604, %v606
        %v609 = vsub.f32 %v605, %v607
        %v610 = vmax.f32 %v608, 0.0
        %v611 = vmax.f32 %v609, 0.0
        %v612 = vadd.f32 %v610, 1e-05
        %v613 = vadd.f32 %v611, 1e-05
        %v614 = vrsqrt.pop %v612
        %v615 = vrsqrt.pop %v613
        %v617 = vlaneseq
        %v618 = vshrl.u32 %v617, 7
        %v619 = vsub.s32 0, %v618
        %v620 = vrot.slane %v252, %v619
        %v621 = vlaneseq
        %v622 = vshrl.u32 %v621, 7
        %v623 = vsub.s32 1, %v622
        %v624 = vrot.slane %v252, %v623
        %v627 = vmul.f32 %v614, %v620
        %v628 = vmul.f32 %v615, %v624
        %v629 = vmul.f32 %v602, %v627
        %v630 = vmul.f32 %v603, %v628
        %v633 = vcombine.low %v629, %v630
        %v635 = vunpack.c.l.s4 1966171168
        %v636 = vunpack.c.0.s8 %v635
        %v637 = vlaneseq
        %v638 = vshrl.u32 %v637, 7
        %v639 = vsub.s32 %v636, %v638
        %v640 = vrot.slane %v633, %v639
        %v642 = vunpack.c.l.s4 1966171168
        %v643 = vunpack.c.0.s8 %v642
        %v644 = vlaneseq
        %v645 = vshrl.u32 %v644, 7
        %v646 = vsub.s32 %v643, %v645
        %v647 = vrot.slane %v640, %v646
        %v649 = vsub.f32 %v253, %v647
        %v650 = vlaneseq
        %v651 = vshrl.u32 %v650, 7
        %v652 = vsub.s32 0, %v651
        %v653 = vrot.slane %v627, %v652
        %v654 = vlaneseq
        %v655 = vshrl.u32 %v654, 7
        %v656 = vsub.s32 0, %v655
        %v657 = vrot.slane %v628, %v656
        %v658 = vmul.f32 %v540, %v653
        %v659 = vmul.f32 %v542, %v657
        %v660 = vmul.f32 %v544, %v653
        %v661 = vmul.f32 %v546, %v657
        %v662 = vmul.f32 %v550, %v653
        %v663 = vmul.f32 %v552, %v657
        %v664 = vmul.f32 %v554, %v653
        %v665 = vmul.f32 %v556, %v657
        %v667 = vlaneseq
        %v668 = vshrl.u32 %v667, 7
        %v669 = vsub.s32 0, %v668
        %v670 = vrot.slane %v649, %v669
        %v671 = vlaneseq
        %v672 = vshrl.u32 %v671, 7
        %v673 = vsub.s32 1, %v672
        %v674 = vrot.slane %v649, %v673
        %v677 = vadd.f32 %v658, %v670
        %v678 = vadd.f32 %v659, %v674
        %v679 = vadd.f32 %v660, %v670
        %v680 = vadd.f32 %v661, %v674
        %v681 = vadd.f32 %v662, %v670
        %v682 = vadd.f32 %v663, %v674
        %v683 = vadd.f32 %v664, %v670
        %v684 = vadd.f32 %v665, %v674
        %vm685 = vcmp.gt.f32.partialorder %v677, 0.0
        %vm686 = vcmp.gt.f32.partialorder %v678, 0.0
        %vm687 = vcmp.gt.f32.partialorder %v679, 0.0
        %vm688 = vcmp.gt.f32.partialorder %v680, 0.0
        %vm689 = vcmp.gt.f32.partialorder %v681, 0.0
        %vm690 = vcmp.gt.f32.partialorder %v682, 0.0
        %vm691 = vcmp.gt.f32.partialorder %v683, 0.0
        %vm692 = vcmp.gt.f32.partialorder %v684, 0.0
        %v693 = vmul.f32 %v677, 0.2
        %v694 = vmul.f32 %v678, 0.2
        %v695 = vmul.f32 %v679, 0.2
        %v696 = vmul.f32 %v680, 0.2
        %v697 = vmul.f32 %v681, 0.2
        %v698 = vmul.f32 %v682, 0.2
        %v699 = vmul.f32 %v683, 0.2
        %v700 = vmul.f32 %v684, 0.2
        %v701 = vsel %vm685, %v677, %v693
        %v702 = vsel %vm686, %v678, %v694
        %v703 = vsel %vm687, %v679, %v695
        %v704 = vsel %vm688, %v680, %v696
        %v705 = vsel %vm689, %v681, %v697
        %v706 = vsel %vm690, %v682, %v698
        %v707 = vsel %vm691, %v683, %v699
        %v708 = vsel %vm692, %v684, %v700
        %v709 = vld [vmem:[%s3] sm:$0xff]
        %v710 = vld [vmem:[%s3 + $0x8] sm:$0xff]
        %v711 = vld [vmem:[%s3 + $0x10] sm:$0xff]
        %v712 = vld [vmem:[%s3 + $0x18] sm:$0xff]
        %v713 = vld [vmem:[%s3 + $0x20] sm:$0xff]
        %v714 = vld [vmem:[%s3 + $0x28] sm:$0xff]
        %v715 = vld [vmem:[%s3 + $0x30] sm:$0xff]
        %v716 = vld [vmem:[%s3 + $0x38] sm:$0xff]
        %v717 = vld [vmem:[%s3 + $0x40] sm:$0xff]
        %v718 = vld [vmem:[%s3 + $0x48] sm:$0xff]
        %v719 = vld [vmem:[%s3 + $0x50] sm:$0xff]
        %v720 = vld [vmem:[%s3 + $0x58] sm:$0xff]
        %v721 = vld [vmem:[%s3 + $0x60] sm:$0xff]
        %v722 = vld [vmem:[%s3 + $0x68] sm:$0xff]
        %v723 = vld [vmem:[%s3 + $0x70] sm:$0xff]
        %v724 = vld [vmem:[%s3 + $0x78] sm:$0xff]
        %v725 = vld [vmem:[%s3 + $0x80] sm:$0xff]
        %v726 = vld [vmem:[%s3 + $0x88] sm:$0xff]
        %v727 = vld [vmem:[%s3 + $0x90] sm:$0xff]
        %v728 = vld [vmem:[%s3 + $0x98] sm:$0xff]
        %v729 = vld [vmem:[%s3 + $0xa0] sm:$0xff]
        %v730 = vld [vmem:[%s3 + $0xa8] sm:$0xff]
        %v731 = vld [vmem:[%s3 + $0xb0] sm:$0xff]
        %v732 = vld [vmem:[%s3 + $0xb8] sm:$0xff]
        %v733 = vld [vmem:[%s3 + $0xc0] sm:$0xff]
        %v734 = vld [vmem:[%s3 + $0xc8] sm:$0xff]
        %v735 = vld [vmem:[%s3 + $0xd0] sm:$0xff]
        %v736 = vld [vmem:[%s3 + $0xd8] sm:$0xff]
        %v737 = vld [vmem:[%s3 + $0xe0] sm:$0xff]
        %v738 = vld [vmem:[%s3 + $0xe8] sm:$0xff]
        %v739 = vld [vmem:[%s3 + $0xf0] sm:$0xff]
        %v740 = vld [vmem:[%s3 + $0xf8] sm:$0xff]
        %v741 = vld [vmem:[%s3 + $0x100] sm:$0xff]
        %v742 = vld [vmem:[%s3 + $0x108] sm:$0xff]
        %v743 = vld [vmem:[%s3 + $0x110] sm:$0xff]
        %v744 = vld [vmem:[%s3 + $0x118] sm:$0xff]
        %v745 = vld [vmem:[%s3 + $0x120] sm:$0xff]
        %v746 = vld [vmem:[%s3 + $0x128] sm:$0xff]
        %v747 = vld [vmem:[%s3 + $0x130] sm:$0xff]
        %v748 = vld [vmem:[%s3 + $0x138] sm:$0xff]
        %v749 = vld [vmem:[%s3 + $0x140] sm:$0xff]
        %v750 = vld [vmem:[%s3 + $0x148] sm:$0xff]
        %v751 = vld [vmem:[%s3 + $0x150] sm:$0xff]
        %v752 = vld [vmem:[%s3 + $0x158] sm:$0xff]
        %v753 = vld [vmem:[%s3 + $0x160] sm:$0xff]
        %v754 = vld [vmem:[%s3 + $0x168] sm:$0xff]
        %v755 = vld [vmem:[%s3 + $0x170] sm:$0xff]
        %v756 = vld [vmem:[%s3 + $0x178] sm:$0xff]
        %v757 = vld [vmem:[%s3 + $0x180] sm:$0xff]
        %v758 = vld [vmem:[%s3 + $0x188] sm:$0xff]
        %v759 = vld [vmem:[%s3 + $0x190] sm:$0xff]
        %v760 = vld [vmem:[%s3 + $0x198] sm:$0xff]
        %v761 = vld [vmem:[%s3 + $0x1a0] sm:$0xff]
        %v762 = vld [vmem:[%s3 + $0x1a8] sm:$0xff]
        %v763 = vld [vmem:[%s3 + $0x1b0] sm:$0xff]
        %v764 = vld [vmem:[%s3 + $0x1b8] sm:$0xff]
        %v765 = vld [vmem:[%s3 + $0x1c0] sm:$0xff]
        %v766 = vld [vmem:[%s3 + $0x1c8] sm:$0xff]
        %v767 = vld [vmem:[%s3 + $0x1d0] sm:$0xff]
        %v768 = vld [vmem:[%s3 + $0x1d8] sm:$0xff]
        %v769 = vld [vmem:[%s3 + $0x1e0] sm:$0xff]
        %v770 = vld [vmem:[%s3 + $0x1e8] sm:$0xff]
        %v771 = vld [vmem:[%s3 + $0x1f0] sm:$0xff]
        %v772 = vld [vmem:[%s3 + $0x1f8] sm:$0xff]
        %v773 = vpack.c.bf16 %v703, %v701
        %v774 = vpack.c.bf16 %v704, %v702
        %v775 = vpack.c.bf16 %v707, %v705
        %v776 = vpack.c.bf16 %v708, %v706
        %v841 = vunpack.c.l.b16 %v709
        %v842 = vunpack.c.h.b16 %v709
        %v843 = vunpack.c.l.b16 %v710
        %v844 = vunpack.c.h.b16 %v710
        %v845 = vunpack.c.l.b16 %v711
        %v846 = vunpack.c.h.b16 %v711
        %v847 = vunpack.c.l.b16 %v712
        %v848 = vunpack.c.h.b16 %v712
        %v849 = vunpack.c.l.b16 %v713
        %v850 = vunpack.c.h.b16 %v713
        %v851 = vunpack.c.l.b16 %v714
        %v852 = vunpack.c.h.b16 %v714
        %v853 = vunpack.c.l.b16 %v715
        %v854 = vunpack.c.h.b16 %v715
        %v855 = vunpack.c.l.b16 %v716
        %v856 = vunpack.c.h.b16 %v716
        %v857 = vunpack.c.l.b16 %v717
        %v858 = vunpack.c.h.b16 %v717
        %v859 = vunpack.c.l.b16 %v718
        %v860 = vunpack.c.h.b16 %v718
        %v861 = vunpack.c.l.b16 %v719
        %v862 = vunpack.c.h.b16 %v719
        %v863 = vunpack.c.l.b16 %v720
        %v864 = vunpack.c.h.b16 %v720
        %v865 = vunpack.c.l.b16 %v721
        %v866 = vunpack.c.h.b16 %v721
        %v867 = vunpack.c.l.b16 %v722
        %v868 = vunpack.c.h.b16 %v722
        %v869 = vunpack.c.l.b16 %v723
        %v870 = vunpack.c.h.b16 %v723
        %v871 = vunpack.c.l.b16 %v724
        %v872 = vunpack.c.h.b16 %v724
        %v873 = vunpack.c.l.b16 %v725
        %v874 = vunpack.c.h.b16 %v725
        %v875 = vunpack.c.l.b16 %v726
        %v876 = vunpack.c.h.b16 %v726
        %v877 = vunpack.c.l.b16 %v727
        %v878 = vunpack.c.h.b16 %v727
        %v879 = vunpack.c.l.b16 %v728
        %v880 = vunpack.c.h.b16 %v728
        %v881 = vunpack.c.l.b16 %v729
        %v882 = vunpack.c.h.b16 %v729
        %v883 = vunpack.c.l.b16 %v730
        %v884 = vunpack.c.h.b16 %v730
        %v885 = vunpack.c.l.b16 %v731
        %v886 = vunpack.c.h.b16 %v731
        %v887 = vunpack.c.l.b16 %v732
        %v888 = vunpack.c.h.b16 %v732
        %v889 = vunpack.c.l.b16 %v733
        %v890 = vunpack.c.h.b16 %v733
        %v891 = vunpack.c.l.b16 %v734
        %v892 = vunpack.c.h.b16 %v734
        %v893 = vunpack.c.l.b16 %v735
        %v894 = vunpack.c.h.b16 %v735
        %v895 = vunpack.c.l.b16 %v736
        %v896 = vunpack.c.h.b16 %v736
        %v897 = vunpack.c.l.b16 %v737
        %v898 = vunpack.c.h.b16 %v737
        %v899 = vunpack.c.l.b16 %v738
        %v900 = vunpack.c.h.b16 %v738
        %v901 = vunpack.c.l.b16 %v739
        %v902 = vunpack.c.h.b16 %v739
        %v903 = vunpack.c.l.b16 %v740
        %v904 = vunpack.c.h.b16 %v740
        %v905 = vunpack.c.l.b16 %v741
        %v906 = vunpack.c.h.b16 %v741
        %v907 = vunpack.c.l.b16 %v742
        %v908 = vunpack.c.h.b16 %v742
        %v909 = vunpack.c.l.b16 %v743
        %v910 = vunpack.c.h.b16 %v743
        %v911 = vunpack.c.l.b16 %v744
        %v912 = vunpack.c.h.b16 %v744
        %v913 = vunpack.c.l.b16 %v745
        %v914 = vunpack.c.h.b16 %v745
        %v915 = vunpack.c.l.b16 %v746
        %v916 = vunpack.c.h.b16 %v746
        %v917 = vunpack.c.l.b16 %v747
        %v918 = vunpack.c.h.b16 %v747
        %v919 = vunpack.c.l.b16 %v748
        %v920 = vunpack.c.h.b16 %v748
        %v921 = vunpack.c.l.b16 %v749
        %v922 = vunpack.c.h.b16 %v749
        %v923 = vunpack.c.l.b16 %v750
        %v924 = vunpack.c.h.b16 %v750
        %v925 = vunpack.c.l.b16 %v751
        %v926 = vunpack.c.h.b16 %v751
        %v927 = vunpack.c.l.b16 %v752
        %v928 = vunpack.c.h.b16 %v752
        %v929 = vunpack.c.l.b16 %v753
        %v930 = vunpack.c.h.b16 %v753
        %v931 = vunpack.c.l.b16 %v754
        %v932 = vunpack.c.h.b16 %v754
        %v933 = vunpack.c.l.b16 %v755
        %v934 = vunpack.c.h.b16 %v755
        %v935 = vunpack.c.l.b16 %v756
        %v936 = vunpack.c.h.b16 %v756
        %v937 = vunpack.c.l.b16 %v757
        %v938 = vunpack.c.h.b16 %v757
        %v939 = vunpack.c.l.b16 %v758
        %v940 = vunpack.c.h.b16 %v758
        %v941 = vunpack.c.l.b16 %v759
        %v942 = vunpack.c.h.b16 %v759
        %v943 = vunpack.c.l.b16 %v760
        %v944 = vunpack.c.h.b16 %v760
        %v945 = vunpack.c.l.b16 %v761
        %v946 = vunpack.c.h.b16 %v761
        %v947 = vunpack.c.l.b16 %v762
        %v948 = vunpack.c.h.b16 %v762
        %v949 = vunpack.c.l.b16 %v763
        %v950 = vunpack.c.h.b16 %v763
        %v951 = vunpack.c.l.b16 %v764
        %v952 = vunpack.c.h.b16 %v764
        %v953 = vunpack.c.l.b16 %v765
        %v954 = vunpack.c.h.b16 %v765
        %v955 = vunpack.c.l.b16 %v766
        %v956 = vunpack.c.h.b16 %v766
        %v957 = vunpack.c.l.b16 %v767
        %v958 = vunpack.c.h.b16 %v767
        %v959 = vunpack.c.l.b16 %v768
        %v960 = vunpack.c.h.b16 %v768
        %v961 = vunpack.c.l.b16 %v769
        %v962 = vunpack.c.h.b16 %v769
        %v963 = vunpack.c.l.b16 %v770
        %v964 = vunpack.c.h.b16 %v770
        %v965 = vunpack.c.l.b16 %v771
        %v966 = vunpack.c.h.b16 %v771
        %v967 = vunpack.c.l.b16 %v772
        %v968 = vunpack.c.h.b16 %v772
        %v969 = vpack.c.b16 %v845, %v841
        %v970 = vpack.c.b16 %v846, %v842
        %v971 = vpack.c.b16 %v847, %v843
        %v972 = vpack.c.b16 %v848, %v844
        %v973 = vpack.c.b16 %v853, %v849
        %v974 = vpack.c.b16 %v854, %v850
        %v975 = vpack.c.b16 %v855, %v851
        %v976 = vpack.c.b16 %v856, %v852
        %v977 = vpack.c.b16 %v861, %v857
        %v978 = vpack.c.b16 %v862, %v858
        %v979 = vpack.c.b16 %v863, %v859
        %v980 = vpack.c.b16 %v864, %v860
        %v981 = vpack.c.b16 %v869, %v865
        %v982 = vpack.c.b16 %v870, %v866
        %v983 = vpack.c.b16 %v871, %v867
        %v984 = vpack.c.b16 %v872, %v868
        %v985 = vpack.c.b16 %v877, %v873
        %v986 = vpack.c.b16 %v878, %v874
        %v987 = vpack.c.b16 %v879, %v875
        %v988 = vpack.c.b16 %v880, %v876
        %v989 = vpack.c.b16 %v885, %v881
        %v990 = vpack.c.b16 %v886, %v882
        %v991 = vpack.c.b16 %v887, %v883
        %v992 = vpack.c.b16 %v888, %v884
        %v993 = vpack.c.b16 %v893, %v889
        %v994 = vpack.c.b16 %v894, %v890
        %v995 = vpack.c.b16 %v895, %v891
        %v996 = vpack.c.b16 %v896, %v892
        %v997 = vpack.c.b16 %v901, %v897
        %v998 = vpack.c.b16 %v902, %v898
        %v999 = vpack.c.b16 %v903, %v899
        %v1000 = vpack.c.b16 %v904, %v900
        %v1001 = vpack.c.b16 %v909, %v905
        %v1002 = vpack.c.b16 %v910, %v906
        %v1003 = vpack.c.b16 %v911, %v907
        %v1004 = vpack.c.b16 %v912, %v908
        %v1005 = vpack.c.b16 %v917, %v913
        %v1006 = vpack.c.b16 %v918, %v914
        %v1007 = vpack.c.b16 %v919, %v915
        %v1008 = vpack.c.b16 %v920, %v916
        %v1009 = vpack.c.b16 %v925, %v921
        %v1010 = vpack.c.b16 %v926, %v922
        %v1011 = vpack.c.b16 %v927, %v923
        %v1012 = vpack.c.b16 %v928, %v924
        %v1013 = vpack.c.b16 %v933, %v929
        %v1014 = vpack.c.b16 %v934, %v930
        %v1015 = vpack.c.b16 %v935, %v931
        %v1016 = vpack.c.b16 %v936, %v932
        %v1017 = vpack.c.b16 %v941, %v937
        %v1018 = vpack.c.b16 %v942, %v938
        %v1019 = vpack.c.b16 %v943, %v939
        %v1020 = vpack.c.b16 %v944, %v940
        %v1021 = vpack.c.b16 %v949, %v945
        %v1022 = vpack.c.b16 %v950, %v946
        %v1023 = vpack.c.b16 %v951, %v947
        %v1024 = vpack.c.b16 %v952, %v948
        %v1025 = vpack.c.b16 %v957, %v953
        %v1026 = vpack.c.b16 %v958, %v954
        %v1027 = vpack.c.b16 %v959, %v955
        %v1028 = vpack.c.b16 %v960, %v956
        %v1029 = vpack.c.b16 %v965, %v961
        %v1030 = vpack.c.b16 %v966, %v962
        %v1031 = vpack.c.b16 %v967, %v963
        %v1032 = vpack.c.b16 %v968, %v964
        %1097 = vmatprep.subr.bf16.mxu0 %v970
        %1098 = vmatpush1.bf16.msra.mxu0 %v969
        %1099 = vmatprep.subr.bf16.mxu0 %v974
        %1100 = vmatpush1.bf16.msra.mxu0 %v973
        %1101 = vmatprep.subr.bf16.mxu0 %v978
        %1102 = vmatpush1.bf16.msra.mxu0 %v977
        %1103 = vmatprep.subr.bf16.mxu0 %v982
        %1104 = vmatpush1.bf16.msra.mxu0 %v981
        %1105 = vmatprep.subr.bf16.mxu0 %v986
        %1106 = vmatpush1.bf16.msra.mxu0 %v985
        %1107 = vmatprep.subr.bf16.mxu0 %v990
        %1108 = vmatpush1.bf16.msra.mxu0 %v989
        %1109 = vmatprep.subr.bf16.mxu0 %v994
        %1110 = vmatpush1.bf16.msra.mxu0 %v993
        %1111 = vmatprep.subr.bf16.mxu0 %v998
        %1112 = vmatpush1.bf16.msra.mxu0 %v997
        %1113 = vmatprep.subr.bf16.mxu0 %v1002
        %1114 = vmatpush1.bf16.msra.mxu0 %v1001
        %1115 = vmatprep.subr.bf16.mxu0 %v1006
        %1116 = vmatpush1.bf16.msra.mxu0 %v1005
        %1117 = vmatprep.subr.bf16.mxu0 %v1010
        %1118 = vmatpush1.bf16.msra.mxu0 %v1009
        %1119 = vmatprep.subr.bf16.mxu0 %v1014
        %1120 = vmatpush1.bf16.msra.mxu0 %v1013
        %1121 = vmatprep.subr.bf16.mxu0 %v1018
        %1122 = vmatpush1.bf16.msra.mxu0 %v1017
        %1123 = vmatprep.subr.bf16.mxu0 %v1022
        %1124 = vmatpush1.bf16.msra.mxu0 %v1021
        %1125 = vmatprep.subr.bf16.mxu0 %v1026
        %1126 = vmatpush1.bf16.msra.mxu0 %v1025
        %1127 = vmatprep.subr.bf16.mxu0 %v1030
        %1128 = vmatpush1.bf16.msra.mxu0 %v1029
        %1129 = vmatprep.mubr.bf16.mxu0 %v774
        %1130 = vmatmul.mubr.bf16.gmra.mrb[0].mxu0 %v773
        %v1131 = vpop.f32.mrb[0].mxu0
        %v1132 = vadd.f32 0.0, %v1131
        %v1133 = vpop.f32.mrb[0].mxu0
        %v1134 = vadd.f32 0.0, %v1133
        %v1135 = vpop.f32.mrb[0].mxu0
        %v1136 = vadd.f32 0.0, %v1135
        %v1137 = vpop.f32.mrb[0].mxu0
        %v1138 = vadd.f32 0.0, %v1137
        %1139 = vmatprep.mubr.bf16.mxu0 %v776
        %1140 = vmatmul.mubr.bf16.gmra.mrb[0].mxu0 %v775
        %v1141 = vpop.f32.mrb[0].mxu0
        %v1142 = vadd.f32 0.0, %v1141
        %v1143 = vpop.f32.mrb[0].mxu0
        %v1144 = vadd.f32 0.0, %v1143
        %v1145 = vpop.f32.mrb[0].mxu0
        %v1146 = vadd.f32 0.0, %v1145
        %v1147 = vpop.f32.mrb[0].mxu0
        %v1148 = vadd.f32 0.0, %v1147
        %1149 = vdwg.mxu0
        %1150 = vmatprep.subr.bf16.mxu0 %v972
        %1151 = vmatpush1.bf16.msra.mxu0 %v971
        %1152 = vmatprep.subr.bf16.mxu0 %v976
        %1153 = vmatpush1.bf16.msra.mxu0 %v975
        %1154 = vmatprep.subr.bf16.mxu0 %v980
        %1155 = vmatpush1.bf16.msra.mxu0 %v979
        %1156 = vmatprep.subr.bf16.mxu0 %v984
        %1157 = vmatpush1.bf16.msra.mxu0 %v983
        %1158 = vmatprep.subr.bf16.mxu0 %v988
        %1159 = vmatpush1.bf16.msra.mxu0 %v987
        %1160 = vmatprep.subr.bf16.mxu0 %v992
        %1161 = vmatpush1.bf16.msra.mxu0 %v991
        %1162 = vmatprep.subr.bf16.mxu0 %v996
        %1163 = vmatpush1.bf16.msra.mxu0 %v995
        %1164 = vmatprep.subr.bf16.mxu0 %v1000
        %1165 = vmatpush1.bf16.msra.mxu0 %v999
        %1166 = vmatprep.subr.bf16.mxu0 %v1004
        %1167 = vmatpush1.bf16.msra.mxu0 %v1003
        %1168 = vmatprep.subr.bf16.mxu0 %v1008
        %1169 = vmatpush1.bf16.msra.mxu0 %v1007
        %1170 = vmatprep.subr.bf16.mxu0 %v1012
        %1171 = vmatpush1.bf16.msra.mxu0 %v1011
        %1172 = vmatprep.subr.bf16.mxu0 %v1016
        %1173 = vmatpush1.bf16.msra.mxu0 %v1015
        %1174 = vmatprep.subr.bf16.mxu0 %v1020
        %1175 = vmatpush1.bf16.msra.mxu0 %v1019
        %1176 = vmatprep.subr.bf16.mxu0 %v1024
        %1177 = vmatpush1.bf16.msra.mxu0 %v1023
        %1178 = vmatprep.subr.bf16.mxu0 %v1028
        %1179 = vmatpush1.bf16.msra.mxu0 %v1027
        %1180 = vmatprep.subr.bf16.mxu0 %v1032
        %1181 = vmatpush1.bf16.msra.mxu0 %v1031
        %1182 = vmatprep.mubr.bf16.mxu0 %v774
        %1183 = vmatmul.mubr.bf16.gmra.mrb[0].mxu0 %v773
        %v1184 = vpop.f32.mrb[0].mxu0
        %v1185 = vadd.f32 0.0, %v1184
        %v1186 = vpop.f32.mrb[0].mxu0
        %v1187 = vadd.f32 0.0, %v1186
        %v1188 = vpop.f32.mrb[0].mxu0
        %v1189 = vadd.f32 0.0, %v1188
        %v1190 = vpop.f32.mrb[0].mxu0
        %v1191 = vadd.f32 0.0, %v1190
        %1192 = vmatprep.mubr.bf16.mxu0 %v776
        %1193 = vmatmul.mubr.bf16.gmra.mrb[0].mxu0 %v775
        %v1194 = vpop.f32.mrb[0].mxu0
        %v1195 = vadd.f32 0.0, %v1194
        %v1196 = vpop.f32.mrb[0].mxu0
        %v1197 = vadd.f32 0.0, %v1196
        %v1198 = vpop.f32.mrb[0].mxu0
        %v1199 = vadd.f32 0.0, %v1198
        %v1200 = vpop.f32.mrb[0].mxu0
        %v1201 = vadd.f32 0.0, %v1200
        %1202 = vdwg.mxu0
        %v1203 = vadd.f32 %v1132, %v1136
        %v1204 = vadd.f32 %v1203, %v1142
        %v1205 = vadd.f32 %v1204, %v1146
        %v1206 = vrot.slane %v1205, 4
        %v1207 = vadd.f32 %v1205, %v1206
        %v1208 = vrot.slane %v1207, 2
        %v1209 = vadd.f32 %v1207, %v1208
        %v1210 = vrot.slane %v1209, 1
        %v1211 = vadd.f32 %v1209, %v1210
        %v1212 = vadd.f32 %v1134, %v1138
        %v1213 = vadd.f32 %v1212, %v1144
        %v1214 = vadd.f32 %v1213, %v1148
        %v1215 = vrot.slane %v1214, 4
        %v1216 = vadd.f32 %v1214, %v1215
        %v1217 = vrot.slane %v1216, 2
        %v1218 = vadd.f32 %v1216, %v1217
        %v1219 = vrot.slane %v1218, 1
        %v1220 = vadd.f32 %v1218, %v1219
        %v1221 = vadd.f32 %v1185, %v1189
        %v1222 = vadd.f32 %v1221, %v1195
        %v1223 = vadd.f32 %v1222, %v1199
        %v1224 = vrot.slane %v1223, 4
        %v1225 = vadd.f32 %v1223, %v1224
        %v1226 = vrot.slane %v1225, 2
        %v1227 = vadd.f32 %v1225, %v1226
        %v1228 = vrot.slane %v1227, 1
        %v1229 = vadd.f32 %v1227, %v1228
        %v1230 = vadd.f32 %v1187, %v1191
        %v1231 = vadd.f32 %v1230, %v1197
        %v1232 = vadd.f32 %v1231, %v1201
        %v1233 = vrot.slane %v1232, 4
        %v1234 = vadd.f32 %v1232, %v1233
        %v1235 = vrot.slane %v1234, 2
        %v1236 = vadd.f32 %v1234, %v1235
        %v1237 = vrot.slane %v1236, 1
        %v1238 = vadd.f32 %v1236, %v1237
        %v1239 = vmul.f32 %v1132, %v1132
        %v1240 = vmul.f32 %v1134, %v1134
        %v1241 = vmul.f32 %v1185, %v1185
        %v1242 = vmul.f32 %v1187, %v1187
        %v1243 = vmul.f32 %v1136, %v1136
        %v1244 = vmul.f32 %v1138, %v1138
        %v1245 = vmul.f32 %v1189, %v1189
        %v1246 = vmul.f32 %v1191, %v1191
        %v1247 = vmul.f32 %v1142, %v1142
        %v1248 = vmul.f32 %v1144, %v1144
        %v1249 = vmul.f32 %v1195, %v1195
        %v1250 = vmul.f32 %v1197, %v1197
        %v1251 = vmul.f32 %v1146, %v1146
        %v1252 = vmul.f32 %v1148, %v1148
        %v1253 = vmul.f32 %v1199, %v1199
        %v1254 = vmul.f32 %v1201, %v1201
        %v1255 = vadd.f32 %v1239, %v1243
        %v1256 = vadd.f32 %v1255, %v1247
        %v1257 = vadd.f32 %v1256, %v1251
        %v1258 = vrot.slane %v1257, 4
        %v1259 = vadd.f32 %v1257, %v1258
        %v1260 = vrot.slane %v1259, 2
        %v1261 = vadd.f32 %v1259, %v1260
        %v1262 = vrot.slane %v1261, 1
        %v1263 = vadd.f32 %v1261, %v1262
        %v1264 = vadd.f32 %v1240, %v1244
        %v1265 = vadd.f32 %v1264, %v1248
        %v1266 = vadd.f32 %v1265, %v1252
        %v1267 = vrot.slane %v1266, 4
        %v1268 = vadd.f32 %v1266, %v1267
        %v1269 = vrot.slane %v1268, 2
        %v1270 = vadd.f32 %v1268, %v1269
        %v1271 = vrot.slane %v1270, 1
        %v1272 = vadd.f32 %v1270, %v1271
        %v1273 = vadd.f32 %v1241, %v1245
        %v1274 = vadd.f32 %v1273, %v1249
        %v1275 = vadd.f32 %v1274, %v1253
        %v1276 = vrot.slane %v1275, 4
        %v1277 = vadd.f32 %v1275, %v1276
        %v1278 = vrot.slane %v1277, 2
        %v1279 = vadd.f32 %v1277, %v1278
        %v1280 = vrot.slane %v1279, 1
        %v1281 = vadd.f32 %v1279, %v1280
        %v1282 = vadd.f32 %v1242, %v1246
        %v1283 = vadd.f32 %v1282, %v1250
        %v1284 = vadd.f32 %v1283, %v1254
        %v1285 = vrot.slane %v1284, 4
        %v1286 = vadd.f32 %v1284, %v1285
        %v1287 = vrot.slane %v1286, 2
        %v1288 = vadd.f32 %v1286, %v1287
        %v1289 = vrot.slane %v1288, 1
        %v1290 = vadd.f32 %v1288, %v1289
        %v1291 = vmul.f32 %v1211, 0.03125
        %v1292 = vmul.f32 %v1220, 0.03125
        %v1293 = vmul.f32 %v1229, 0.03125
        %v1294 = vmul.f32 %v1238, 0.03125
        %v1295 = vmul.f32 %v1263, 0.03125
        %v1296 = vmul.f32 %v1272, 0.03125
        %v1297 = vmul.f32 %v1281, 0.03125
        %v1298 = vmul.f32 %v1290, 0.03125
        %v1299 = vmul.f32 %v1291, %v1291
        %v1300 = vmul.f32 %v1292, %v1292
        %v1301 = vmul.f32 %v1293, %v1293
        %v1302 = vmul.f32 %v1294, %v1294
        %v1303 = vsub.f32 %v1295, %v1299
        %v1304 = vsub.f32 %v1296, %v1300
        %v1305 = vsub.f32 %v1297, %v1301
        %v1306 = vsub.f32 %v1298, %v1302
        %v1307 = vmax.f32 %v1303, 0.0
        %v1308 = vmax.f32 %v1304, 0.0
        %v1309 = vmax.f32 %v1305, 0.0
        %v1310 = vmax.f32 %v1306, 0.0
        %v1311 = vadd.f32 %v1307, 1e-05
        %v1312 = vadd.f32 %v1308, 1e-05
        %v1313 = vadd.f32 %v1309, 1e-05
        %v1314 = vadd.f32 %v1310, 1e-05
        %v1315 = vrsqrt.pop %v1311
        %v1316 = vrsqrt.pop %v1312
        %v1317 = vrsqrt.pop %v1313
        %v1318 = vrsqrt.pop %v1314
        %v1320 = vlaneseq
        %v1321 = vshrl.u32 %v1320, 7
        %v1322 = vsub.s32 0, %v1321
        %v1323 = vrot.slane %v254, %v1322
        %v1324 = vlaneseq
        %v1325 = vshrl.u32 %v1324, 7
        %v1326 = vsub.s32 1, %v1325
        %v1327 = vrot.slane %v254, %v1326
        %v1328 = vlaneseq
        %v1329 = vshrl.u32 %v1328, 7
        %v1330 = vsub.s32 2, %v1329
        %v1331 = vrot.slane %v254, %v1330
        %v1332 = vlaneseq
        %v1333 = vshrl.u32 %v1332, 7
        %v1334 = vsub.s32 3, %v1333
        %v1335 = vrot.slane %v254, %v1334
        %v1340 = vmul.f32 %v1315, %v1323
        %v1341 = vmul.f32 %v1316, %v1327
        %v1342 = vmul.f32 %v1317, %v1331
        %v1343 = vmul.f32 %v1318, %v1335
        %v1344 = vmul.f32 %v1291, %v1340
        %v1345 = vmul.f32 %v1292, %v1341
        %v1346 = vmul.f32 %v1293, %v1342
        %v1347 = vmul.f32 %v1294, %v1343
        %v1352 = vcombine.low %v1344, %v1345
        %v1353 = vcombine.low %v1346, %v1347
        %v1355 = vunpack.c.l.s4 1966171168
        %v1356 = vunpack.c.0.s8 %v1355
        %v1357 = vlaneseq
        %v1358 = vshrl.u32 %v1357, 7
        %v1359 = vsub.s32 %v1356, %v1358
        %v1360 = vrot.slane %v1352, %v1359
        %v1362 = vunpack.c.l.s4 1966171168
        %v1363 = vunpack.c.0.s8 %v1362
        %v1364 = vlaneseq
        %v1365 = vshrl.u32 %v1364, 7
        %v1366 = vsub.s32 %v1363, %v1365
        %v1367 = vrot.slane %v1353, %v1366
        %v1368 = vcombine.low %v1360, %v1367
        %v1370 = vunpack.c.l.s4 1966171168
        %v1371 = vunpack.c.0.s8 %v1370
        %v1372 = vlaneseq
        %v1373 = vshrl.u32 %v1372, 7
        %v1374 = vsub.s32 %v1371, %v1373
        %v1375 = vrot.slane %v1368, %v1374
        %v1377 = vsub.f32 %v255, %v1375
        %v1378 = vlaneseq
        %v1379 = vshrl.u32 %v1378, 7
        %v1380 = vsub.s32 0, %v1379
        %v1381 = vrot.slane %v1340, %v1380
        %v1382 = vlaneseq
        %v1383 = vshrl.u32 %v1382, 7
        %v1384 = vsub.s32 0, %v1383
        %v1385 = vrot.slane %v1341, %v1384
        %v1386 = vlaneseq
        %v1387 = vshrl.u32 %v1386, 7
        %v1388 = vsub.s32 0, %v1387
        %v1389 = vrot.slane %v1342, %v1388
        %v1390 = vlaneseq
        %v1391 = vshrl.u32 %v1390, 7
        %v1392 = vsub.s32 0, %v1391
        %v1393 = vrot.slane %v1343, %v1392
        %v1394 = vmul.f32 %v1132, %v1381
        %v1395 = vmul.f32 %v1134, %v1385
        %v1396 = vmul.f32 %v1185, %v1389
        %v1397 = vmul.f32 %v1187, %v1393
        %v1398 = vmul.f32 %v1136, %v1381
        %v1399 = vmul.f32 %v1138, %v1385
        %v1400 = vmul.f32 %v1189, %v1389
        %v1401 = vmul.f32 %v1191, %v1393
        %v1402 = vmul.f32 %v1142, %v1381
        %v1403 = vmul.f32 %v1144, %v1385
        %v1404 = vmul.f32 %v1195, %v1389
        %v1405 = vmul.f32 %v1197, %v1393
        %v1406 = vmul.f32 %v1146, %v1381
        %v1407 = vmul.f32 %v1148, %v1385
        %v1408 = vmul.f32 %v1199, %v1389
        %v1409 = vmul.f32 %v1201, %v1393
        %v1411 = vlaneseq
        %v1412 = vshrl.u32 %v1411, 7
        %v1413 = vsub.s32 0, %v1412
        %v1414 = vrot.slane %v1377, %v1413
        %v1415 = vlaneseq
        %v1416 = vshrl.u32 %v1415, 7
        %v1417 = vsub.s32 1, %v1416
        %v1418 = vrot.slane %v1377, %v1417
        %v1419 = vlaneseq
        %v1420 = vshrl.u32 %v1419, 7
        %v1421 = vsub.s32 2, %v1420
        %v1422 = vrot.slane %v1377, %v1421
        %v1423 = vlaneseq
        %v1424 = vshrl.u32 %v1423, 7
        %v1425 = vsub.s32 3, %v1424
        %v1426 = vrot.slane %v1377, %v1425
        %v1431 = vadd.f32 %v1394, %v1414
        %v1432 = vadd.f32 %v1395, %v1418
        %v1433 = vadd.f32 %v1396, %v1422
        %v1434 = vadd.f32 %v1397, %v1426
        %v1435 = vadd.f32 %v1398, %v1414
        %v1436 = vadd.f32 %v1399, %v1418
        %v1437 = vadd.f32 %v1400, %v1422
        %v1438 = vadd.f32 %v1401, %v1426
        %v1439 = vadd.f32 %v1402, %v1414
        %v1440 = vadd.f32 %v1403, %v1418
        %v1441 = vadd.f32 %v1404, %v1422
        %v1442 = vadd.f32 %v1405, %v1426
        %v1443 = vadd.f32 %v1406, %v1414
        %v1444 = vadd.f32 %v1407, %v1418
        %v1445 = vadd.f32 %v1408, %v1422
        %v1446 = vadd.f32 %v1409, %v1426
        %vm1447 = vcmp.gt.f32.partialorder %v1431, 0.0
        %vm1448 = vcmp.gt.f32.partialorder %v1432, 0.0
        %vm1449 = vcmp.gt.f32.partialorder %v1433, 0.0
        %vm1450 = vcmp.gt.f32.partialorder %v1434, 0.0
        %vm1451 = vcmp.gt.f32.partialorder %v1435, 0.0
        %vm1452 = vcmp.gt.f32.partialorder %v1436, 0.0
        %vm1453 = vcmp.gt.f32.partialorder %v1437, 0.0
        %vm1454 = vcmp.gt.f32.partialorder %v1438, 0.0
        %vm1455 = vcmp.gt.f32.partialorder %v1439, 0.0
        %vm1456 = vcmp.gt.f32.partialorder %v1440, 0.0
        %vm1457 = vcmp.gt.f32.partialorder %v1441, 0.0
        %vm1458 = vcmp.gt.f32.partialorder %v1442, 0.0
        %vm1459 = vcmp.gt.f32.partialorder %v1443, 0.0
        %vm1460 = vcmp.gt.f32.partialorder %v1444, 0.0
        %vm1461 = vcmp.gt.f32.partialorder %v1445, 0.0
        %vm1462 = vcmp.gt.f32.partialorder %v1446, 0.0
        %v1463 = vmul.f32 %v1431, 0.2
        %v1464 = vmul.f32 %v1432, 0.2
        %v1465 = vmul.f32 %v1433, 0.2
        %v1466 = vmul.f32 %v1434, 0.2
        %v1467 = vmul.f32 %v1435, 0.2
        %v1468 = vmul.f32 %v1436, 0.2
        %v1469 = vmul.f32 %v1437, 0.2
        %v1470 = vmul.f32 %v1438, 0.2
        %v1471 = vmul.f32 %v1439, 0.2
        %v1472 = vmul.f32 %v1440, 0.2
        %v1473 = vmul.f32 %v1441, 0.2
        %v1474 = vmul.f32 %v1442, 0.2
        %v1475 = vmul.f32 %v1443, 0.2
        %v1476 = vmul.f32 %v1444, 0.2
        %v1477 = vmul.f32 %v1445, 0.2
        %v1478 = vmul.f32 %v1446, 0.2
        %v1479 = vsel %vm1447, %v1431, %v1463
        %v1480 = vsel %vm1448, %v1432, %v1464
        %v1481 = vsel %vm1449, %v1433, %v1465
        %v1482 = vsel %vm1450, %v1434, %v1466
        %v1483 = vsel %vm1451, %v1435, %v1467
        %v1484 = vsel %vm1452, %v1436, %v1468
        %v1485 = vsel %vm1453, %v1437, %v1469
        %v1486 = vsel %vm1454, %v1438, %v1470
        %v1487 = vsel %vm1455, %v1439, %v1471
        %v1488 = vsel %vm1456, %v1440, %v1472
        %v1489 = vsel %vm1457, %v1441, %v1473
        %v1490 = vsel %vm1458, %v1442, %v1474
        %v1491 = vsel %vm1459, %v1443, %v1475
        %v1492 = vsel %vm1460, %v1444, %v1476
        %v1493 = vsel %vm1461, %v1445, %v1477
        %v1494 = vsel %vm1462, %v1446, %v1478
        %v1495 = vld [vmem:[%s4] sm:$0xff]
        %v1496 = vld [vmem:[%s4 + $0x8] sm:$0xff]
        %v1497 = vld [vmem:[%s4 + $0x10] sm:$0xff]
        %v1498 = vld [vmem:[%s4 + $0x18] sm:$0xf]
        %v1499 = vld [vmem:[%s4 + $0x1c] sm:$0xff]
        %v1500 = vld [vmem:[%s4 + $0x24] sm:$0xff]
        %v1501 = vld [vmem:[%s4 + $0x2c] sm:$0xff]
        %v1502 = vld [vmem:[%s4 + $0x34] sm:$0xf]
        %v1503 = vld [vmem:[%s4 + $0x38] sm:$0xff]
        %v1504 = vld [vmem:[%s4 + $0x40] sm:$0xff]
        %v1505 = vld [vmem:[%s4 + $0x48] sm:$0xff]
        %v1506 = vld [vmem:[%s4 + $0x50] sm:$0xf]
        %v1507 = vld [vmem:[%s4 + $0x54] sm:$0xff]
        %v1508 = vld [vmem:[%s4 + $0x5c] sm:$0xff]
        %v1509 = vld [vmem:[%s4 + $0x64] sm:$0xff]
        %v1510 = vld [vmem:[%s4 + $0x6c] sm:$0xf]
        %v1511 = vld [vmem:[%s4 + $0x70] sm:$0xff]
        %v1512 = vld [vmem:[%s4 + $0x78] sm:$0xff]
        %v1513 = vld [vmem:[%s4 + $0x80] sm:$0xff]
        %v1514 = vld [vmem:[%s4 + $0x88] sm:$0xf]
        %v1515 = vld [vmem:[%s4 + $0x8c] sm:$0xff]
        %v1516 = vld [vmem:[%s4 + $0x94] sm:$0xff]
        %v1517 = vld [vmem:[%s4 + $0x9c] sm:$0xff]
        %v1518 = vld [vmem:[%s4 + $0xa4] sm:$0xf]
        %v1519 = vld [vmem:[%s4 + $0xa8] sm:$0xff]
        %v1520 = vld [vmem:[%s4 + $0xb0] sm:$0xff]
        %v1521 = vld [vmem:[%s4 + $0xb8] sm:$0xff]
        %v1522 = vld [vmem:[%s4 + $0xc0] sm:$0xf]
        %v1523 = vld [vmem:[%s4 + $0xc4] sm:$0xff]
        %v1524 = vld [vmem:[%s4 + $0xcc] sm:$0xff]
        %v1525 = vld [vmem:[%s4 + $0xd4] sm:$0xff]
        %v1526 = vld [vmem:[%s4 + $0xdc] sm:$0xf]
        %v1527 = vld [vmem:[%s4 + $0xe0] sm:$0xff]
        %v1528 = vld [vmem:[%s4 + $0xe8] sm:$0xff]
        %v1529 = vld [vmem:[%s4 + $0xf0] sm:$0xff]
        %v1530 = vld [vmem:[%s4 + $0xf8] sm:$0xf]
        %v1531 = vld [vmem:[%s4 + $0xfc] sm:$0xff]
        %v1532 = vld [vmem:[%s4 + $0x104] sm:$0xff]
        %v1533 = vld [vmem:[%s4 + $0x10c] sm:$0xff]
        %v1534 = vld [vmem:[%s4 + $0x114] sm:$0xf]
        %v1535 = vld [vmem:[%s4 + $0x118] sm:$0xff]
        %v1536 = vld [vmem:[%s4 + $0x120] sm:$0xff]
        %v1537 = vld [vmem:[%s4 + $0x128] sm:$0xff]
        %v1538 = vld [vmem:[%s4 + $0x130] sm:$0xf]
        %v1539 = vld [vmem:[%s4 + $0x134] sm:$0xff]
        %v1540 = vld [vmem:[%s4 + $0x13c] sm:$0xff]
        %v1541 = vld [vmem:[%s4 + $0x144] sm:$0xff]
        %v1542 = vld [vmem:[%s4 + $0x14c] sm:$0xf]
        %v1543 = vld [vmem:[%s4 + $0x150] sm:$0xff]
        %v1544 = vld [vmem:[%s4 + $0x158] sm:$0xff]
        %v1545 = vld [vmem:[%s4 + $0x160] sm:$0xff]
        %v1546 = vld [vmem:[%s4 + $0x168] sm:$0xf]
        %v1547 = vld [vmem:[%s4 + $0x16c] sm:$0xff]
        %v1548 = vld [vmem:[%s4 + $0x174] sm:$0xff]
        %v1549 = vld [vmem:[%s4 + $0x17c] sm:$0xff]
        %v1550 = vld [vmem:[%s4 + $0x184] sm:$0xf]
        %v1551 = vld [vmem:[%s4 + $0x188] sm:$0xff]
        %v1552 = vld [vmem:[%s4 + $0x190] sm:$0xff]
        %v1553 = vld [vmem:[%s4 + $0x198] sm:$0xff]
        %v1554 = vld [vmem:[%s4 + $0x1a0] sm:$0xf]
        %v1555 = vld [vmem:[%s4 + $0x1a4] sm:$0xff]
        %v1556 = vld [vmem:[%s4 + $0x1ac] sm:$0xff]
        %v1557 = vld [vmem:[%s4 + $0x1b4] sm:$0xff]
        %v1558 = vld [vmem:[%s4 + $0x1bc] sm:$0xf]
        %v1559 = vld [vmem:[%s4 + $0x1c0] sm:$0xff]
        %v1560 = vld [vmem:[%s4 + $0x1c8] sm:$0xff]
        %v1561 = vld [vmem:[%s4 + $0x1d0] sm:$0xff]
        %v1562 = vld [vmem:[%s4 + $0x1d8] sm:$0xf]
        %v1563 = vld [vmem:[%s4 + $0x1dc] sm:$0xff]
        %v1564 = vld [vmem:[%s4 + $0x1e4] sm:$0xff]
        %v1565 = vld [vmem:[%s4 + $0x1ec] sm:$0xff]
        %v1566 = vld [vmem:[%s4 + $0x1f4] sm:$0xf]
        %v1567 = vld [vmem:[%s4 + $0x1f8] sm:$0xff]
        %v1568 = vld [vmem:[%s4 + $0x200] sm:$0xff]
        %v1569 = vld [vmem:[%s4 + $0x208] sm:$0xff]
        %v1570 = vld [vmem:[%s4 + $0x210] sm:$0xf]
        %v1571 = vld [vmem:[%s4 + $0x214] sm:$0xff]
        %v1572 = vld [vmem:[%s4 + $0x21c] sm:$0xff]
        %v1573 = vld [vmem:[%s4 + $0x224] sm:$0xff]
        %v1574 = vld [vmem:[%s4 + $0x22c] sm:$0xf]
        %v1575 = vld [vmem:[%s4 + $0x230] sm:$0xff]
        %v1576 = vld [vmem:[%s4 + $0x238] sm:$0xff]
        %v1577 = vld [vmem:[%s4 + $0x240] sm:$0xff]
        %v1578 = vld [vmem:[%s4 + $0x248] sm:$0xf]
        %v1579 = vld [vmem:[%s4 + $0x24c] sm:$0xff]
        %v1580 = vld [vmem:[%s4 + $0x254] sm:$0xff]
        %v1581 = vld [vmem:[%s4 + $0x25c] sm:$0xff]
        %v1582 = vld [vmem:[%s4 + $0x264] sm:$0xf]
        %v1583 = vld [vmem:[%s4 + $0x268] sm:$0xff]
        %v1584 = vld [vmem:[%s4 + $0x270] sm:$0xff]
        %v1585 = vld [vmem:[%s4 + $0x278] sm:$0xff]
        %v1586 = vld [vmem:[%s4 + $0x280] sm:$0xf]
        %v1587 = vld [vmem:[%s4 + $0x284] sm:$0xff]
        %v1588 = vld [vmem:[%s4 + $0x28c] sm:$0xff]
        %v1589 = vld [vmem:[%s4 + $0x294] sm:$0xff]
        %v1590 = vld [vmem:[%s4 + $0x29c] sm:$0xf]
        %v1591 = vld [vmem:[%s4 + $0x2a0] sm:$0xff]
        %v1592 = vld [vmem:[%s4 + $0x2a8] sm:$0xff]
        %v1593 = vld [vmem:[%s4 + $0x2b0] sm:$0xff]
        %v1594 = vld [vmem:[%s4 + $0x2b8] sm:$0xf]
        %v1595 = vld [vmem:[%s4 + $0x2bc] sm:$0xff]
        %v1596 = vld [vmem:[%s4 + $0x2c4] sm:$0xff]
        %v1597 = vld [vmem:[%s4 + $0x2cc] sm:$0xff]
        %v1598 = vld [vmem:[%s4 + $0x2d4] sm:$0xf]
        %v1599 = vld [vmem:[%s4 + $0x2d8] sm:$0xff]
        %v1600 = vld [vmem:[%s4 + $0x2e0] sm:$0xff]
        %v1601 = vld [vmem:[%s4 + $0x2e8] sm:$0xff]
        %v1602 = vld [vmem:[%s4 + $0x2f0] sm:$0xf]
        %v1603 = vld [vmem:[%s4 + $0x2f4] sm:$0xff]
        %v1604 = vld [vmem:[%s4 + $0x2fc] sm:$0xff]
        %v1605 = vld [vmem:[%s4 + $0x304] sm:$0xff]
        %v1606 = vld [vmem:[%s4 + $0x30c] sm:$0xf]
        %v1607 = vld [vmem:[%s4 + $0x310] sm:$0xff]
        %v1608 = vld [vmem:[%s4 + $0x318] sm:$0xff]
        %v1609 = vld [vmem:[%s4 + $0x320] sm:$0xff]
        %v1610 = vld [vmem:[%s4 + $0x328] sm:$0xf]
        %v1611 = vld [vmem:[%s4 + $0x32c] sm:$0xff]
        %v1612 = vld [vmem:[%s4 + $0x334] sm:$0xff]
        %v1613 = vld [vmem:[%s4 + $0x33c] sm:$0xff]
        %v1614 = vld [vmem:[%s4 + $0x344] sm:$0xf]
        %v1615 = vld [vmem:[%s4 + $0x348] sm:$0xff]
        %v1616 = vld [vmem:[%s4 + $0x350] sm:$0xff]
        %v1617 = vld [vmem:[%s4 + $0x358] sm:$0xff]
        %v1618 = vld [vmem:[%s4 + $0x360] sm:$0xf]
        %v1619 = vld [vmem:[%s4 + $0x364] sm:$0xff]
        %v1620 = vld [vmem:[%s4 + $0x36c] sm:$0xff]
        %v1621 = vld [vmem:[%s4 + $0x374] sm:$0xff]
        %v1622 = vld [vmem:[%s4 + $0x37c] sm:$0xf]
        %v1623 = vld [vmem:[%s4 + $0x380] sm:$0xff]
        %v1624 = vld [vmem:[%s4 + $0x388] sm:$0xff]
        %v1625 = vld [vmem:[%s4 + $0x390] sm:$0xff]
        %v1626 = vld [vmem:[%s4 + $0x398] sm:$0xf]
        %v1627 = vld [vmem:[%s4 + $0x39c] sm:$0xff]
        %v1628 = vld [vmem:[%s4 + $0x3a4] sm:$0xff]
        %v1629 = vld [vmem:[%s4 + $0x3ac] sm:$0xff]
        %v1630 = vld [vmem:[%s4 + $0x3b4] sm:$0xf]
        %v1631 = vld [vmem:[%s4 + $0x3b8] sm:$0xff]
        %v1632 = vld [vmem:[%s4 + $0x3c0] sm:$0xff]
        %v1633 = vld [vmem:[%s4 + $0x3c8] sm:$0xff]
        %v1634 = vld [vmem:[%s4 + $0x3d0] sm:$0xf]
        %v1635 = vld [vmem:[%s4 + $0x3d4] sm:$0xff]
        %v1636 = vld [vmem:[%s4 + $0x3dc] sm:$0xff]
        %v1637 = vld [vmem:[%s4 + $0x3e4] sm:$0xff]
        %v1638 = vld [vmem:[%s4 + $0x3ec] sm:$0xf]
        %v1639 = vld [vmem:[%s4 + $0x3f0] sm:$0xff]
        %v1640 = vld [vmem:[%s4 + $0x3f8] sm:$0xff]
        %v1641 = vld [vmem:[%s4 + $0x400] sm:$0xff]
        %v1642 = vld [vmem:[%s4 + $0x408] sm:$0xf]
        %v1643 = vld [vmem:[%s4 + $0x40c] sm:$0xff]
        %v1644 = vld [vmem:[%s4 + $0x414] sm:$0xff]
        %v1645 = vld [vmem:[%s4 + $0x41c] sm:$0xff]
        %v1646 = vld [vmem:[%s4 + $0x424] sm:$0xf]
        %v1647 = vld [vmem:[%s4 + $0x428] sm:$0xff]
        %v1648 = vld [vmem:[%s4 + $0x430] sm:$0xff]
        %v1649 = vld [vmem:[%s4 + $0x438] sm:$0xff]
        %v1650 = vld [vmem:[%s4 + $0x440] sm:$0xf]
        %v1651 = vld [vmem:[%s4 + $0x444] sm:$0xff]
        %v1652 = vld [vmem:[%s4 + $0x44c] sm:$0xff]
        %v1653 = vld [vmem:[%s4 + $0x454] sm:$0xff]
        %v1654 = vld [vmem:[%s4 + $0x45c] sm:$0xf]
        %v1655 = vld [vmem:[%s4 + $0x460] sm:$0xff]
        %v1656 = vld [vmem:[%s4 + $0x468] sm:$0xff]
        %v1657 = vld [vmem:[%s4 + $0x470] sm:$0xff]
        %v1658 = vld [vmem:[%s4 + $0x478] sm:$0xf]
        %v1659 = vld [vmem:[%s4 + $0x47c] sm:$0xff]
        %v1660 = vld [vmem:[%s4 + $0x484] sm:$0xff]
        %v1661 = vld [vmem:[%s4 + $0x48c] sm:$0xff]
        %v1662 = vld [vmem:[%s4 + $0x494] sm:$0xf]
        %v1663 = vld [vmem:[%s4 + $0x498] sm:$0xff]
        %v1664 = vld [vmem:[%s4 + $0x4a0] sm:$0xff]
        %v1665 = vld [vmem:[%s4 + $0x4a8] sm:$0xff]
        %v1666 = vld [vmem:[%s4 + $0x4b0] sm:$0xf]
        %v1667 = vld [vmem:[%s4 + $0x4b4] sm:$0xff]
        %v1668 = vld [vmem:[%s4 + $0x4bc] sm:$0xff]
        %v1669 = vld [vmem:[%s4 + $0x4c4] sm:$0xff]
        %v1670 = vld [vmem:[%s4 + $0x4cc] sm:$0xf]
        %v1671 = vld [vmem:[%s4 + $0x4d0] sm:$0xff]
        %v1672 = vld [vmem:[%s4 + $0x4d8] sm:$0xff]
        %v1673 = vld [vmem:[%s4 + $0x4e0] sm:$0xff]
        %v1674 = vld [vmem:[%s4 + $0x4e8] sm:$0xf]
        %v1675 = vld [vmem:[%s4 + $0x4ec] sm:$0xff]
        %v1676 = vld [vmem:[%s4 + $0x4f4] sm:$0xff]
        %v1677 = vld [vmem:[%s4 + $0x4fc] sm:$0xff]
        %v1678 = vld [vmem:[%s4 + $0x504] sm:$0xf]
        %v1679 = vld [vmem:[%s4 + $0x508] sm:$0xff]
        %v1680 = vld [vmem:[%s4 + $0x510] sm:$0xff]
        %v1681 = vld [vmem:[%s4 + $0x518] sm:$0xff]
        %v1682 = vld [vmem:[%s4 + $0x520] sm:$0xf]
        %v1683 = vld [vmem:[%s4 + $0x524] sm:$0xff]
        %v1684 = vld [vmem:[%s4 + $0x52c] sm:$0xff]
        %v1685 = vld [vmem:[%s4 + $0x534] sm:$0xff]
        %v1686 = vld [vmem:[%s4 + $0x53c] sm:$0xf]
        %v1687 = vld [vmem:[%s4 + $0x540] sm:$0xff]
        %v1688 = vld [vmem:[%s4 + $0x548] sm:$0xff]
        %v1689 = vld [vmem:[%s4 + $0x550] sm:$0xff]
        %v1690 = vld [vmem:[%s4 + $0x558] sm:$0xf]
        %v1691 = vld [vmem:[%s4 + $0x55c] sm:$0xff]
        %v1692 = vld [vmem:[%s4 + $0x564] sm:$0xff]
        %v1693 = vld [vmem:[%s4 + $0x56c] sm:$0xff]
        %v1694 = vld [vmem:[%s4 + $0x574] sm:$0xf]
        %v1695 = vld [vmem:[%s4 + $0x578] sm:$0xff]
        %v1696 = vld [vmem:[%s4 + $0x580] sm:$0xff]
        %v1697 = vld [vmem:[%s4 + $0x588] sm:$0xff]
        %v1698 = vld [vmem:[%s4 + $0x590] sm:$0xf]
        %v1699 = vld [vmem:[%s4 + $0x594] sm:$0xff]
        %v1700 = vld [vmem:[%s4 + $0x59c] sm:$0xff]
        %v1701 = vld [vmem:[%s4 + $0x5a4] sm:$0xff]
        %v1702 = vld [vmem:[%s4 + $0x5ac] sm:$0xf]
        %v1703 = vld [vmem:[%s4 + $0x5b0] sm:$0xff]
        %v1704 = vld [vmem:[%s4 + $0x5b8] sm:$0xff]
        %v1705 = vld [vmem:[%s4 + $0x5c0] sm:$0xff]
        %v1706 = vld [vmem:[%s4 + $0x5c8] sm:$0xf]
        %v1707 = vld [vmem:[%s4 + $0x5cc] sm:$0xff]
        %v1708 = vld [vmem:[%s4 + $0x5d4] sm:$0xff]
        %v1709 = vld [vmem:[%s4 + $0x5dc] sm:$0xff]
        %v1710 = vld [vmem:[%s4 + $0x5e4] sm:$0xf]
        %v1711 = vld [vmem:[%s4 + $0x5e8] sm:$0xff]
        %v1712 = vld [vmem:[%s4 + $0x5f0] sm:$0xff]
        %v1713 = vld [vmem:[%s4 + $0x5f8] sm:$0xff]
        %v1714 = vld [vmem:[%s4 + $0x600] sm:$0xf]
        %v1715 = vld [vmem:[%s4 + $0x604] sm:$0xff]
        %v1716 = vld [vmem:[%s4 + $0x60c] sm:$0xff]
        %v1717 = vld [vmem:[%s4 + $0x614] sm:$0xff]
        %v1718 = vld [vmem:[%s4 + $0x61c] sm:$0xf]
        %v1719 = vld [vmem:[%s4 + $0x620] sm:$0xff]
        %v1720 = vld [vmem:[%s4 + $0x628] sm:$0xff]
        %v1721 = vld [vmem:[%s4 + $0x630] sm:$0xff]
        %v1722 = vld [vmem:[%s4 + $0x638] sm:$0xf]
        %v1723 = vld [vmem:[%s4 + $0x63c] sm:$0xff]
        %v1724 = vld [vmem:[%s4 + $0x644] sm:$0xff]
        %v1725 = vld [vmem:[%s4 + $0x64c] sm:$0xff]
        %v1726 = vld [vmem:[%s4 + $0x654] sm:$0xf]
        %v1727 = vld [vmem:[%s4 + $0x658] sm:$0xff]
        %v1728 = vld [vmem:[%s4 + $0x660] sm:$0xff]
        %v1729 = vld [vmem:[%s4 + $0x668] sm:$0xff]
        %v1730 = vld [vmem:[%s4 + $0x670] sm:$0xf]
        %v1731 = vld [vmem:[%s4 + $0x674] sm:$0xff]
        %v1732 = vld [vmem:[%s4 + $0x67c] sm:$0xff]
        %v1733 = vld [vmem:[%s4 + $0x684] sm:$0xff]
        %v1734 = vld [vmem:[%s4 + $0x68c] sm:$0xf]
        %v1735 = vld [vmem:[%s4 + $0x690] sm:$0xff]
        %v1736 = vld [vmem:[%s4 + $0x698] sm:$0xff]
        %v1737 = vld [vmem:[%s4 + $0x6a0] sm:$0xff]
        %v1738 = vld [vmem:[%s4 + $0x6a8] sm:$0xf]
        %v1739 = vld [vmem:[%s4 + $0x6ac] sm:$0xff]
        %v1740 = vld [vmem:[%s4 + $0x6b4] sm:$0xff]
        %v1741 = vld [vmem:[%s4 + $0x6bc] sm:$0xff]
        %v1742 = vld [vmem:[%s4 + $0x6c4] sm:$0xf]
        %v1743 = vld [vmem:[%s4 + $0x6c8] sm:$0xff]
        %v1744 = vld [vmem:[%s4 + $0x6d0] sm:$0xff]
        %v1745 = vld [vmem:[%s4 + $0x6d8] sm:$0xff]
        %v1746 = vld [vmem:[%s4 + $0x6e0] sm:$0xf]
        %v1747 = vld [vmem:[%s4 + $0x6e4] sm:$0xff]
        %v1748 = vld [vmem:[%s4 + $0x6ec] sm:$0xff]
        %v1749 = vld [vmem:[%s4 + $0x6f4] sm:$0xff]
        %v1750 = vld [vmem:[%s4 + $0x6fc] sm:$0xf]
        %v1751 = vpack.c.bf16 %v1483, %v1479
        %v1752 = vpack.c.bf16 %v1484, %v1480
        %v1753 = vpack.c.bf16 %v1485, %v1481
        %v1754 = vpack.c.bf16 %v1486, %v1482
        %v1755 = vpack.c.bf16 %v1491, %v1487
        %v1756 = vpack.c.bf16 %v1492, %v1488
        %v1757 = vpack.c.bf16 %v1493, %v1489
        %v1758 = vpack.c.bf16 %v1494, %v1490
        %v1760 = vlaneseq
        %v1761 = vshrl.u32 %v1760, 7
        %v1762 = vsub.s32 0, %v1761
        %v1763 = vrot.slane %v256, %v1762
        %v1764 = vlaneseq
        %v1765 = vshrl.u32 %v1764, 7
        %v1766 = vsub.s32 1, %v1765
        %v1767 = vrot.slane %v256, %v1766
        %v1768 = vlaneseq
        %v1769 = vshrl.u32 %v1768, 7
        %v1770 = vsub.s32 2, %v1769
        %v1771 = vrot.slane %v256, %v1770
        %v1772 = vlaneseq
        %v1773 = vshrl.u32 %v1772, 7
        %v1774 = vsub.s32 3, %v1773
        %v1775 = vrot.slane %v256, %v1774
        %v1776 = vlaneseq
        %v1777 = vshrl.u32 %v1776, 7
        %v1778 = vsub.s32 4, %v1777
        %v1779 = vrot.slane %v256, %v1778
        %v1780 = vlaneseq
        %v1781 = vshrl.u32 %v1780, 7
        %v1782 = vsub.s32 5, %v1781
        %v1783 = vrot.slane %v256, %v1782
        %v1784 = vlaneseq
        %v1785 = vshrl.u32 %v1784, 7
        %v1786 = vsub.s32 6, %v1785
        %v1787 = vrot.slane %v256, %v1786
        %v2051 = vunpack.c.l.b16 %v1495
        %v2052 = vunpack.c.h.b16 %v1495
        %v2053 = vunpack.c.l.b16 %v1496
        %v2054 = vunpack.c.h.b16 %v1496
        %v2055 = vunpack.c.l.b16 %v1497
        %v2056 = vunpack.c.h.b16 %v1497
        %v2057 = vunpack.c.l.b16 %v1498
        %v2058 = vunpack.c.l.b16 %v1499
        %v2059 = vunpack.c.h.b16 %v1499
        %v2060 = vunpack.c.l.b16 %v1500
        %v2061 = vunpack.c.h.b16 %v1500
        %v2062 = vunpack.c.l.b16 %v1501
        %v2063 = vunpack.c.h.b16 %v1501
        %v2064 = vunpack.c.l.b16 %v1502
        %v2065 = vunpack.c.l.b16 %v1503
        %v2066 = vunpack.c.h.b16 %v1503
        %v2067 = vunpack.c.l.b16 %v1504
        %v2068 = vunpack.c.h.b16 %v1504
        %v2069 = vunpack.c.l.b16 %v1505
        %v2070 = vunpack.c.h.b16 %v1505
        %v2071 = vunpack.c.l.b16 %v1506
        %v2072 = vunpack.c.l.b16 %v1507
        %v2073 = vunpack.c.h.b16 %v1507
        %v2074 = vunpack.c.l.b16 %v1508
        %v2075 = vunpack.c.h.b16 %v1508
        %v2076 = vunpack.c.l.b16 %v1509
        %v2077 = vunpack.c.h.b16 %v1509
        %v2078 = vunpack.c.l.b16 %v1510
        %v2079 = vunpack.c.l.b16 %v1511
        %v2080 = vunpack.c.h.b16 %v1511
        %v2081 = vunpack.c.l.b16 %v1512
        %v2082 = vunpack.c.h.b16 %v1512
        %v2083 = vunpack.c.l.b16 %v1513
        %v2084 = vunpack.c.h.b16 %v1513
        %v2085 = vunpack.c.l.b16 %v1514
        %v2086 = vunpack.c.l.b16 %v1515
        %v2087 = vunpack.c.h.b16 %v1515
        %v2088 = vunpack.c.l.b16 %v1516
        %v2089 = vunpack.c.h.b16 %v1516
        %v2090 = vunpack.c.l.b16 %v1517
        %v2091 = vunpack.c.h.b16 %v1517
        %v2092 = vunpack.c.l.b16 %v1518
        %v2093 = vunpack.c.l.b16 %v1519
        %v2094 = vunpack.c.h.b16 %v1519
        %v2095 = vunpack.c.l.b16 %v1520
        %v2096 = vunpack.c.h.b16 %v1520
        %v2097 = vunpack.c.l.b16 %v1521
        %v2098 = vunpack.c.h.b16 %v1521
        %v2099 = vunpack.c.l.b16 %v1522
        %v2100 = vunpack.c.l.b16 %v1523
        %v2101 = vunpack.c.h.b16 %v1523
        %v2102 = vunpack.c.l.b16 %v1524
        %v2103 = vunpack.c.h.b16 %v1524
        %v2104 = vunpack.c.l.b16 %v1525
        %v2105 = vunpack.c.h.b16 %v1525
        %v2106 = vunpack.c.l.b16 %v1526
        %v2107 = vunpack.c.l.b16 %v1527
        %v2108 = vunpack.c.h.b16 %v1527
        %v2109 = vunpack.c.l.b16 %v1528
        %v2110 = vunpack.c.h.b16 %v1528
        %v2111 = vunpack.c.l.b16 %v1529
        %v2112 = vunpack.c.h.b16 %v1529
        %v2113 = vunpack.c.l.b16 %v1530
        %v2114 = vunpack.c.l.b16 %v1531
        %v2115 = vunpack.c.h.b16 %v1531
        %v2116 = vunpack.c.l.b16 %v1532
        %v2117 = vunpack.c.h.b16 %v1532
        %v2118 = vunpack.c.l.b16 %v1533
        %v2119 = vunpack.c.h.b16 %v1533
        %v2120 = vunpack.c.l.b16 %v1534
        %v2121 = vunpack.c.l.b16 %v1535
        %v2122 = vunpack.c.h.b16 %v1535
        %v2123 = vunpack.c.l.b16 %v1536
        %v2124 = vunpack.c.h.b16 %v1536
        %v2125 = vunpack.c.l.b16 %v1537
        %v2126 = vunpack.c.h.b16 %v1537
        %v2127 = vunpack.c.l.b16 %v1538
        %v2128 = vunpack.c.l.b16 %v1539
        %v2129 = vunpack.c.h.b16 %v1539
        %v2130 = vunpack.c.l.b16 %v1540
        %v2131 = vunpack.c.h.b16 %v1540
        %v2132 = vunpack.c.l.b16 %v1541
        %v2133 = vunpack.c.h.b16 %v1541
        %v2134 = vunpack.c.l.b16 %v1542
        %v2135 = vunpack.c.l.b16 %v1543
        %v2136 = vunpack.c.h.b16 %v1543
        %v2137 = vunpack.c.l.b16 %v1544
        %v2138 = vunpack.c.h.b16 %v1544
        %v2139 = vunpack.c.l.b16 %v1545
        %v2140 = vunpack.c.h.b16 %v1545
        %v2141 = vunpack.c.l.b16 %v1546
        %v2142 = vunpack.c.l.b16 %v1547
        %v2143 = vunpack.c.h.b16 %v1547
        %v2144 = vunpack.c.l.b16 %v1548
        %v2145 = vunpack.c.h.b16 %v1548
        %v2146 = vunpack.c.l.b16 %v1549
        %v2147 = vunpack.c.h.b16 %v1549
        %v2148 = vunpack.c.l.b16 %v1550
        %v2149 = vunpack.c.l.b16 %v1551
        %v2150 = vunpack.c.h.b16 %v1551
        %v2151 = vunpack.c.l.b16 %v1552
        %v2152 = vunpack.c.h.b16 %v1552
        %v2153 = vunpack.c.l.b16 %v1553
        %v2154 = vunpack.c.h.b16 %v1553
        %v2155 = vunpack.c.l.b16 %v1554
        %v2156 = vunpack.c.l.b16 %v1555
        %v2157 = vunpack.c.h.b16 %v1555
        %v2158 = vunpack.c.l.b16 %v1556
        %v2159 = vunpack.c.h.b16 %v1556
        %v2160 = vunpack.c.l.b16 %v1557
        %v2161 = vunpack.c.h.b16 %v1557
        %v2162 = vunpack.c.l.b16 %v1558
        %v2163 = vunpack.c.l.b16 %v1559
        %v2164 = vunpack.c.h.b16 %v1559
        %v2165 = vunpack.c.l.b16 %v1560
        %v2166 = vunpack.c.h.b16 %v1560
        %v2167 = vunpack.c.l.b16 %v1561
        %v2168 = vunpack.c.h.b16 %v1561
        %v2169 = vunpack.c.l.b16 %v1562
        %v2170 = vunpack.c.l.b16 %v1563
        %v2171 = vunpack.c.h.b16 %v1563
        %v2172 = vunpack.c.l.b16 %v1564
        %v2173 = vunpack.c.h.b16 %v1564
        %v2174 = vunpack.c.l.b16 %v1565
        %v2175 = vunpack.c.h.b16 %v1565
        %v2176 = vunpack.c.l.b16 %v1566
        %v2177 = vunpack.c.l.b16 %v1567
        %v2178 = vunpack.c.h.b16 %v1567
        %v2179 = vunpack.c.l.b16 %v1568
        %v2180 = vunpack.c.h.b16 %v1568
        %v2181 = vunpack.c.l.b16 %v1569
        %v2182 = vunpack.c.h.b16 %v1569
        %v2183 = vunpack.c.l.b16 %v1570
        %v2184 = vunpack.c.l.b16 %v1571
        %v2185 = vunpack.c.h.b16 %v1571
        %v2186 = vunpack.c.l.b16 %v1572
        %v2187 = vunpack.c.h.b16 %v1572
        %v2188 = vunpack.c.l.b16 %v1573
        %v2189 = vunpack.c.h.b16 %v1573
        %v2190 = vunpack.c.l.b16 %v1574
        %v2191 = vunpack.c.l.b16 %v1575
        %v2192 = vunpack.c.h.b16 %v1575
        %v2193 = vunpack.c.l.b16 %v1576
        %v2194 = vunpack.c.h.b16 %v1576
        %v2195 = vunpack.c.l.b16 %v1577
        %v2196 = vunpack.c.h.b16 %v1577
        %v2197 = vunpack.c.l.b16 %v1578
        %v2198 = vunpack.c.l.b16 %v1579
        %v2199 = vunpack.c.h.b16 %v1579
        %v2200 = vunpack.c.l.b16 %v1580
        %v2201 = vunpack.c.h.b16 %v1580
        %v2202 = vunpack.c.l.b16 %v1581
        %v2203 = vunpack.c.h.b16 %v1581
        %v2204 = vunpack.c.l.b16 %v1582
        %v2205 = vunpack.c.l.b16 %v1583
        %v2206 = vunpack.c.h.b16 %v1583
        %v2207 = vunpack.c.l.b16 %v1584
        %v2208 = vunpack.c.h.b16 %v1584
        %v2209 = vunpack.c.l.b16 %v1585
        %v2210 = vunpack.c.h.b16 %v1585
        %v2211 = vunpack.c.l.b16 %v1586
        %v2212 = vunpack.c.l.b16 %v1587
        %v2213 = vunpack.c.h.b16 %v1587
        %v2214 = vunpack.c.l.b16 %v1588
        %v2215 = vunpack.c.h.b16 %v1588
        %v2216 = vunpack.c.l.b16 %v1589
        %v2217 = vunpack.c.h.b16 %v1589
        %v2218 = vunpack.c.l.b16 %v1590
        %v2219 = vunpack.c.l.b16 %v1591
        %v2220 = vunpack.c.h.b16 %v1591
        %v2221 = vunpack.c.l.b16 %v1592
        %v2222 = vunpack.c.h.b16 %v1592
        %v2223 = vunpack.c.l.b16 %v1593
        %v2224 = vunpack.c.h.b16 %v1593
        %v2225 = vunpack.c.l.b16 %v1594
        %v2226 = vunpack.c.l.b16 %v1595
        %v2227 = vunpack.c.h.b16 %v1595
        %v2228 = vunpack.c.l.b16 %v1596
        %v2229 = vunpack.c.h.b16 %v1596
        %v2230 = vunpack.c.l.b16 %v1597
        %v2231 = vunpack.c.h.b16 %v1597
        %v2232 = vunpack.c.l.b16 %v1598
        %v2233 = vunpack.c.l.b16 %v1599
        %v2234 = vunpack.c.h.b16 %v1599
        %v2235 = vunpack.c.l.b16 %v1600
        %v2236 = vunpack.c.h.b16 %v1600
        %v2237 = vunpack.c.l.b16 %v1601
        %v2238 = vunpack.c.h.b16 %v1601
        %v2239 = vunpack.c.l.b16 %v1602
        %v2240 = vunpack.c.l.b16 %v1603
        %v2241 = vunpack.c.h.b16 %v1603
        %v2242 = vunpack.c.l.b16 %v1604
        %v2243 = vunpack.c.h.b16 %v1604
        %v2244 = vunpack.c.l.b16 %v1605
        %v2245 = vunpack.c.h.b16 %v1605
        %v2246 = vunpack.c.l.b16 %v1606
        %v2247 = vunpack.c.l.b16 %v1607
        %v2248 = vunpack.c.h.b16 %v1607
        %v2249 = vunpack.c.l.b16 %v1608
        %v2250 = vunpack.c.h.b16 %v1608
        %v2251 = vunpack.c.l.b16 %v1609
        %v2252 = vunpack.c.h.b16 %v1609
        %v2253 = vunpack.c.l.b16 %v1610
        %v2254 = vunpack.c.l.b16 %v1611
        %v2255 = vunpack.c.h.b16 %v1611
        %v2256 = vunpack.c.l.b16 %v1612
        %v2257 = vunpack.c.h.b16 %v1612
        %v2258 = vunpack.c.l.b16 %v1613
        %v2259 = vunpack.c.h.b16 %v1613
        %v2260 = vunpack.c.l.b16 %v1614
        %v2261 = vunpack.c.l.b16 %v1615
        %v2262 = vunpack.c.h.b16 %v1615
        %v2263 = vunpack.c.l.b16 %v1616
        %v2264 = vunpack.c.h.b16 %v1616
        %v2265 = vunpack.c.l.b16 %v1617
        %v2266 = vunpack.c.h.b16 %v1617
        %v2267 = vunpack.c.l.b16 %v1618
        %v2268 = vunpack.c.l.b16 %v1619
        %v2269 = vunpack.c.h.b16 %v1619
        %v2270 = vunpack.c.l.b16 %v1620
        %v2271 = vunpack.c.h.b16 %v1620
        %v2272 = vunpack.c.l.b16 %v1621
        %v2273 = vunpack.c.h.b16 %v1621
        %v2274 = vunpack.c.l.b16 %v1622
        %v2275 = vunpack.c.l.b16 %v1623
        %v2276 = vunpack.c.h.b16 %v1623
        %v2277 = vunpack.c.l.b16 %v1624
        %v2278 = vunpack.c.h.b16 %v1624
        %v2279 = vunpack.c.l.b16 %v1625
        %v2280 = vunpack.c.h.b16 %v1625
        %v2281 = vunpack.c.l.b16 %v1626
        %v2282 = vunpack.c.l.b16 %v1627
        %v2283 = vunpack.c.h.b16 %v1627
        %v2284 = vunpack.c.l.b16 %v1628
        %v2285 = vunpack.c.h.b16 %v1628
        %v2286 = vunpack.c.l.b16 %v1629
        %v2287 = vunpack.c.h.b16 %v1629
        %v2288 = vunpack.c.l.b16 %v1630
        %v2289 = vunpack.c.l.b16 %v1631
        %v2290 = vunpack.c.h.b16 %v1631
        %v2291 = vunpack.c.l.b16 %v1632
        %v2292 = vunpack.c.h.b16 %v1632
        %v2293 = vunpack.c.l.b16 %v1633
        %v2294 = vunpack.c.h.b16 %v1633
        %v2295 = vunpack.c.l.b16 %v1634
        %v2296 = vunpack.c.l.b16 %v1635
        %v2297 = vunpack.c.h.b16 %v1635
        %v2298 = vunpack.c.l.b16 %v1636
        %v2299 = vunpack.c.h.b16 %v1636
        %v2300 = vunpack.c.l.b16 %v1637
        %v2301 = vunpack.c.h.b16 %v1637
        %v2302 = vunpack.c.l.b16 %v1638
        %v2303 = vunpack.c.l.b16 %v1639
        %v2304 = vunpack.c.h.b16 %v1639
        %v2305 = vunpack.c.l.b16 %v1640
        %v2306 = vunpack.c.h.b16 %v1640
        %v2307 = vunpack.c.l.b16 %v1641
        %v2308 = vunpack.c.h.b16 %v1641
        %v2309 = vunpack.c.l.b16 %v1642
        %v2310 = vunpack.c.l.b16 %v1643
        %v2311 = vunpack.c.h.b16 %v1643
        %v2312 = vunpack.c.l.b16 %v1644
        %v2313 = vunpack.c.h.b16 %v1644
        %v2314 = vunpack.c.l.b16 %v1645
        %v2315 = vunpack.c.h.b16 %v1645
        %v2316 = vunpack.c.l.b16 %v1646
        %v2317 = vunpack.c.l.b16 %v1647
        %v2318 = vunpack.c.h.b16 %v1647
        %v2319 = vunpack.c.l.b16 %v1648
        %v2320 = vunpack.c.h.b16 %v1648
        %v2321 = vunpack.c.l.b16 %v1649
        %v2322 = vunpack.c.h.b16 %v1649
        %v2323 = vunpack.c.l.b16 %v1650
        %v2324 = vunpack.c.l.b16 %v1651
        %v2325 = vunpack.c.h.b16 %v1651
        %v2326 = vunpack.c.l.b16 %v1652
        %v2327 = vunpack.c.h.b16 %v1652
        %v2328 = vunpack.c.l.b16 %v1653
        %v2329 = vunpack.c.h.b16 %v1653
        %v2330 = vunpack.c.l.b16 %v1654
        %v2331 = vunpack.c.l.b16 %v1655
        %v2332 = vunpack.c.h.b16 %v1655
        %v2333 = vunpack.c.l.b16 %v1656
        %v2334 = vunpack.c.h.b16 %v1656
        %v2335 = vunpack.c.l.b16 %v1657
        %v2336 = vunpack.c.h.b16 %v1657
        %v2337 = vunpack.c.l.b16 %v1658
        %v2338 = vunpack.c.l.b16 %v1659
        %v2339 = vunpack.c.h.b16 %v1659
        %v2340 = vunpack.c.l.b16 %v1660
        %v2341 = vunpack.c.h.b16 %v1660
        %v2342 = vunpack.c.l.b16 %v1661
        %v2343 = vunpack.c.h.b16 %v1661
        %v2344 = vunpack.c.l.b16 %v1662
        %v2345 = vunpack.c.l.b16 %v1663
        %v2346 = vunpack.c.h.b16 %v1663
        %v2347 = vunpack.c.l.b16 %v1664
        %v2348 = vunpack.c.h.b16 %v1664
        %v2349 = vunpack.c.l.b16 %v1665
        %v2350 = vunpack.c.h.b16 %v1665
        %v2351 = vunpack.c.l.b16 %v1666
        %v2352 = vunpack.c.l.b16 %v1667
        %v2353 = vunpack.c.h.b16 %v1667
        %v2354 = vunpack.c.l.b16 %v1668
        %v2355 = vunpack.c.h.b16 %v1668
        %v2356 = vunpack.c.l.b16 %v1669
        %v2357 = vunpack.c.h.b16 %v1669
        %v2358 = vunpack.c.l.b16 %v1670
        %v2359 = vunpack.c.l.b16 %v1671
        %v2360 = vunpack.c.h.b16 %v1671
        %v2361 = vunpack.c.l.b16 %v1672
        %v2362 = vunpack.c.h.b16 %v1672
        %v2363 = vunpack.c.l.b16 %v1673
        %v2364 = vunpack.c.h.b16 %v1673
        %v2365 = vunpack.c.l.b16 %v1674
        %v2366 = vunpack.c.l.b16 %v1675
        %v2367 = vunpack.c.h.b16 %v1675
        %v2368 = vunpack.c.l.b16 %v1676
        %v2369 = vunpack.c.h.b16 %v1676
        %v2370 = vunpack.c.l.b16 %v1677
        %v2371 = vunpack.c.h.b16 %v1677
        %v2372 = vunpack.c.l.b16 %v1678
        %v2373 = vunpack.c.l.b16 %v1679
        %v2374 = vunpack.c.h.b16 %v1679
        %v2375 = vunpack.c.l.b16 %v1680
        %v2376 = vunpack.c.h.b16 %v1680
        %v2377 = vunpack.c.l.b16 %v1681
        %v2378 = vunpack.c.h.b16 %v1681
        %v2379 = vunpack.c.l.b16 %v1682
        %v2380 = vunpack.c.l.b16 %v1683
        %v2381 = vunpack.c.h.b16 %v1683
        %v2382 = vunpack.c.l.b16 %v1684
        %v2383 = vunpack.c.h.b16 %v1684
        %v2384 = vunpack.c.l.b16 %v1685
        %v2385 = vunpack.c.h.b16 %v1685
        %v2386 = vunpack.c.l.b16 %v1686
        %v2387 = vunpack.c.l.b16 %v1687
        %v2388 = vunpack.c.h.b16 %v1687
        %v2389 = vunpack.c.l.b16 %v1688
        %v2390 = vunpack.c.h.b16 %v1688
        %v2391 = vunpack.c.l.b16 %v1689
        %v2392 = vunpack.c.h.b16 %v1689
        %v2393 = vunpack.c.l.b16 %v1690
        %v2394 = vunpack.c.l.b16 %v1691
        %v2395 = vunpack.c.h.b16 %v1691
        %v2396 = vunpack.c.l.b16 %v1692
        %v2397 = vunpack.c.h.b16 %v1692
        %v2398 = vunpack.c.l.b16 %v1693
        %v2399 = vunpack.c.h.b16 %v1693
        %v2400 = vunpack.c.l.b16 %v1694
        %v2401 = vunpack.c.l.b16 %v1695
        %v2402 = vunpack.c.h.b16 %v1695
        %v2403 = vunpack.c.l.b16 %v1696
        %v2404 = vunpack.c.h.b16 %v1696
        %v2405 = vunpack.c.l.b16 %v1697
        %v2406 = vunpack.c.h.b16 %v1697
        %v2407 = vunpack.c.l.b16 %v1698
        %v2408 = vunpack.c.l.b16 %v1699
        %v2409 = vunpack.c.h.b16 %v1699
        %v2410 = vunpack.c.l.b16 %v1700
        %v2411 = vunpack.c.h.b16 %v1700
        %v2412 = vunpack.c.l.b16 %v1701
        %v2413 = vunpack.c.h.b16 %v1701
        %v2414 = vunpack.c.l.b16 %v1702
        %v2415 = vunpack.c.l.b16 %v1703
        %v2416 = vunpack.c.h.b16 %v1703
        %v2417 = vunpack.c.l.b16 %v1704
        %v2418 = vunpack.c.h.b16 %v1704
        %v2419 = vunpack.c.l.b16 %v1705
        %v2420 = vunpack.c.h.b16 %v1705
        %v2421 = vunpack.c.l.b16 %v1706
        %v2422 = vunpack.c.l.b16 %v1707
        %v2423 = vunpack.c.h.b16 %v1707
        %v2424 = vunpack.c.l.b16 %v1708
        %v2425 = vunpack.c.h.b16 %v1708
        %v2426 = vunpack.c.l.b16 %v1709
        %v2427 = vunpack.c.h.b16 %v1709
        %v2428 = vunpack.c.l.b16 %v1710
        %v2429 = vunpack.c.l.b16 %v1711
        %v2430 = vunpack.c.h.b16 %v1711
        %v2431 = vunpack.c.l.b16 %v1712
        %v2432 = vunpack.c.h.b16 %v1712
        %v2433 = vunpack.c.l.b16 %v1713
        %v2434 = vunpack.c.h.b16 %v1713
        %v2435 = vunpack.c.l.b16 %v1714
        %v2436 = vunpack.c.l.b16 %v1715
        %v2437 = vunpack.c.h.b16 %v1715
        %v2438 = vunpack.c.l.b16 %v1716
        %v2439 = vunpack.c.h.b16 %v1716
        %v2440 = vunpack.c.l.b16 %v1717
        %v2441 = vunpack.c.h.b16 %v1717
        %v2442 = vunpack.c.l.b16 %v1718
        %v2443 = vunpack.c.l.b16 %v1719
        %v2444 = vunpack.c.h.b16 %v1719
        %v2445 = vunpack.c.l.b16 %v1720
        %v2446 = vunpack.c.h.b16 %v1720
        %v2447 = vunpack.c.l.b16 %v1721
        %v2448 = vunpack.c.h.b16 %v1721
        %v2449 = vunpack.c.l.b16 %v1722
        %v2450 = vunpack.c.l.b16 %v1723
        %v2451 = vunpack.c.h.b16 %v1723
        %v2452 = vunpack.c.l.b16 %v1724
        %v2453 = vunpack.c.h.b16 %v1724
        %v2454 = vunpack.c.l.b16 %v1725
        %v2455 = vunpack.c.h.b16 %v1725
        %v2456 = vunpack.c.l.b16 %v1726
        %v2457 = vunpack.c.l.b16 %v1727
        %v2458 = vunpack.c.h.b16 %v1727
        %v2459 = vunpack.c.l.b16 %v1728
        %v2460 = vunpack.c.h.b16 %v1728
        %v2461 = vunpack.c.l.b16 %v1729
        %v2462 = vunpack.c.h.b16 %v1729
        %v2463 = vunpack.c.l.b16 %v1730
        %v2464 = vunpack.c.l.b16 %v1731
        %v2465 = vunpack.c.h.b16 %v1731
        %v2466 = vunpack.c.l.b16 %v1732
        %v2467 = vunpack.c.h.b16 %v1732
        %v2468 = vunpack.c.l.b16 %v1733
        %v2469 = vunpack.c.h.b16 %v1733
        %v2470 = vunpack.c.l.b16 %v1734
        %v2471 = vunpack.c.l.b16 %v1735
        %v2472 = vunpack.c.h.b16 %v1735
        %v2473 = vunpack.c.l.b16 %v1736
        %v2474 = vunpack.c.h.b16 %v1736
        %v2475 = vunpack.c.l.b16 %v1737
        %v2476 = vunpack.c.h.b16 %v1737
        %v2477 = vunpack.c.l.b16 %v1738
        %v2478 = vunpack.c.l.b16 %v1739
        %v2479 = vunpack.c.h.b16 %v1739
        %v2480 = vunpack.c.l.b16 %v1740
        %v2481 = vunpack.c.h.b16 %v1740
        %v2482 = vunpack.c.l.b16 %v1741
        %v2483 = vunpack.c.h.b16 %v1741
        %v2484 = vunpack.c.l.b16 %v1742
        %v2485 = vunpack.c.l.b16 %v1743
        %v2486 = vunpack.c.h.b16 %v1743
        %v2487 = vunpack.c.l.b16 %v1744
        %v2488 = vunpack.c.h.b16 %v1744
        %v2489 = vunpack.c.l.b16 %v1745
        %v2490 = vunpack.c.h.b16 %v1745
        %v2491 = vunpack.c.l.b16 %v1746
        %v2492 = vunpack.c.l.b16 %v1747
        %v2493 = vunpack.c.h.b16 %v1747
        %v2494 = vunpack.c.l.b16 %v1748
        %v2495 = vunpack.c.h.b16 %v1748
        %v2496 = vunpack.c.l.b16 %v1749
        %v2497 = vunpack.c.h.b16 %v1749
        %v2498 = vunpack.c.l.b16 %v1750
        %v2499 = vpack.c.b16 %v2058, %v2051
        %v2500 = vpack.c.b16 %v2059, %v2052
        %v2501 = vpack.c.b16 %v2060, %v2053
        %v2502 = vpack.c.b16 %v2061, %v2054
        %v2503 = vpack.c.b16 %v2062, %v2055
        %v2504 = vpack.c.b16 %v2063, %v2056
        %v2505 = vpack.c.b16 %v2064, %v2057
        %v2506 = vpack.c.b16 %v2072, %v2065
        %v2507 = vpack.c.b16 %v2073, %v2066
        %v2508 = vpack.c.b16 %v2074, %v2067
        %v2509 = vpack.c.b16 %v2075, %v2068
        %v2510 = vpack.c.b16 %v2076, %v2069
        %v2511 = vpack.c.b16 %v2077, %v2070
        %v2512 = vpack.c.b16 %v2078, %v2071
        %v2513 = vpack.c.b16 %v2086, %v2079
        %v2514 = vpack.c.b16 %v2087, %v2080
        %v2515 = vpack.c.b16 %v2088, %v2081
        %v2516 = vpack.c.b16 %v2089, %v2082
        %v2517 = vpack.c.b16 %v2090, %v2083
        %v2518 = vpack.c.b16 %v2091, %v2084
        %v2519 = vpack.c.b16 %v2092, %v2085
        %v2520 = vpack.c.b16 %v2100, %v2093
        %v2521 = vpack.c.b16 %v2101, %v2094
        %v2522 = vpack.c.b16 %v2102, %v2095
        %v2523 = vpack.c.b16 %v2103, %v2096
        %v2524 = vpack.c.b16 %v2104, %v2097
        %v2525 = vpack.c.b16 %v2105, %v2098
        %v2526 = vpack.c.b16 %v2106, %v2099
        %v2527 = vpack.c.b16 %v2114, %v2107
        %v2528 = vpack.c.b16 %v2115, %v2108
        %v2529 = vpack.c.b16 %v2116, %v2109
        %v2530 = vpack.c.b16 %v2117, %v2110
        %v2531 = vpack.c.b16 %v2118, %v2111
        %v2532 = vpack.c.b16 %v2119, %v2112
        %v2533 = vpack.c.b16 %v2120, %v2113
        %v2534 = vpack.c.b16 %v2128, %v2121
        %v2535 = vpack.c.b16 %v2129, %v2122
        %v2536 = vpack.c.b16 %v2130, %v2123
        %v2537 = vpack.c.b16 %v2131, %v2124
        %v2538 = vpack.c.b16 %v2132, %v2125
        %v2539 = vpack.c.b16 %v2133, %v2126
        %v2540 = vpack.c.b16 %v2134, %v2127
        %v2541 = vpack.c.b16 %v2142, %v2135
        %v2542 = vpack.c.b16 %v2143, %v2136
        %v2543 = vpack.c.b16 %v2144, %v2137
        %v2544 = vpack.c.b16 %v2145, %v2138
        %v2545 = vpack.c.b16 %v2146, %v2139
        %v2546 = vpack.c.b16 %v2147, %v2140
        %v2547 = vpack.c.b16 %v2148, %v2141
        %v2548 = vpack.c.b16 %v2156, %v2149
        %v2549 = vpack.c.b16 %v2157, %v2150
        %v2550 = vpack.c.b16 %v2158, %v2151
        %v2551 = vpack.c.b16 %v2159, %v2152
        %v2552 = vpack.c.b16 %v2160, %v2153
        %v2553 = vpack.c.b16 %v2161, %v2154
        %v2554 = vpack.c.b16 %v2162, %v2155
        %v2555 = vpack.c.b16 %v2170, %v2163
        %v2556 = vpack.c.b16 %v2171, %v2164
        %v2557 = vpack.c.b16 %v2172, %v2165
        %v2558 = vpack.c.b16 %v2173, %v2166
        %v2559 = vpack.c.b16 %v2174, %v2167
        %v2560 = vpack.c.b16 %v2175, %v2168
        %v2561 = vpack.c.b16 %v2176, %v2169
        %v2562 = vpack.c.b16 %v2184, %v2177
        %v2563 = vpack.c.b16 %v2185, %v2178
        %v2564 = vpack.c.b16 %v2186, %v2179
        %v2565 = vpack.c.b16 %v2187, %v2180
        %v2566 = vpack.c.b16 %v2188, %v2181
        %v2567 = vpack.c.b16 %v2189, %v2182
        %v2568 = vpack.c.b16 %v2190, %v2183
        %v2569 = vpack.c.b16 %v2198, %v2191
        %v2570 = vpack.c.b16 %v2199, %v2192
        %v2571 = vpack.c.b16 %v2200, %v2193
        %v2572 = vpack.c.b16 %v2201, %v2194
        %v2573 = vpack.c.b16 %v2202, %v2195
        %v2574 = vpack.c.b16 %v2203, %v2196
        %v2575 = vpack.c.b16 %v2204, %v2197
        %v2576 = vpack.c.b16 %v2212, %v2205
        %v2577 = vpack.c.b16 %v2213, %v2206
        %v2578 = vpack.c.b16 %v2214, %v2207
        %v2579 = vpack.c.b16 %v2215, %v2208
        %v2580 = vpack.c.b16 %v2216, %v2209
        %v2581 = vpack.c.b16 %v2217, %v2210
        %v2582 = vpack.c.b16 %v2218, %v2211
        %v2583 = vpack.c.b16 %v2226, %v2219
        %v2584 = vpack.c.b16 %v2227, %v2220
        %v2585 = vpack.c.b16 %v2228, %v2221
        %v2586 = vpack.c.b16 %v2229, %v2222
        %v2587 = vpack.c.b16 %v2230, %v2223
        %v2588 = vpack.c.b16 %v2231, %v2224
        %v2589 = vpack.c.b16 %v2232, %v2225
        %v2590 = vpack.c.b16 %v2240, %v2233
        %v2591 = vpack.c.b16 %v2241, %v2234
        %v2592 = vpack.c.b16 %v2242, %v2235
        %v2593 = vpack.c.b16 %v2243, %v2236
        %v2594 = vpack.c.b16 %v2244, %v2237
        %v2595 = vpack.c.b16 %v2245, %v2238
        %v2596 = vpack.c.b16 %v2246, %v2239
        %v2597 = vpack.c.b16 %v2254, %v2247
        %v2598 = vpack.c.b16 %v2255, %v2248
        %v2599 = vpack.c.b16 %v2256, %v2249
        %v2600 = vpack.c.b16 %v2257, %v2250
        %v2601 = vpack.c.b16 %v2258, %v2251
        %v2602 = vpack.c.b16 %v2259, %v2252
        %v2603 = vpack.c.b16 %v2260, %v2253
        %v2604 = vpack.c.b16 %v2268, %v2261
        %v2605 = vpack.c.b16 %v2269, %v2262
        %v2606 = vpack.c.b16 %v2270, %v2263
        %v2607 = vpack.c.b16 %v2271, %v2264
        %v2608 = vpack.c.b16 %v2272, %v2265
        %v2609 = vpack.c.b16 %v2273, %v2266
        %v2610 = vpack.c.b16 %v2274, %v2267
        %v2611 = vpack.c.b16 %v2282, %v2275
        %v2612 = vpack.c.b16 %v2283, %v2276
        %v2613 = vpack.c.b16 %v2284, %v2277
        %v2614 = vpack.c.b16 %v2285, %v2278
        %v2615 = vpack.c.b16 %v2286, %v2279
        %v2616 = vpack.c.b16 %v2287, %v2280
        %v2617 = vpack.c.b16 %v2288, %v2281
        %v2618 = vpack.c.b16 %v2296, %v2289
        %v2619 = vpack.c.b16 %v2297, %v2290
        %v2620 = vpack.c.b16 %v2298, %v2291
        %v2621 = vpack.c.b16 %v2299, %v2292
        %v2622 = vpack.c.b16 %v2300, %v2293
        %v2623 = vpack.c.b16 %v2301, %v2294
        %v2624 = vpack.c.b16 %v2302, %v2295
        %v2625 = vpack.c.b16 %v2310, %v2303
        %v2626 = vpack.c.b16 %v2311, %v2304
        %v2627 = vpack.c.b16 %v2312, %v2305
        %v2628 = vpack.c.b16 %v2313, %v2306
        %v2629 = vpack.c.b16 %v2314, %v2307
        %v2630 = vpack.c.b16 %v2315, %v2308
        %v2631 = vpack.c.b16 %v2316, %v2309
        %v2632 = vpack.c.b16 %v2324, %v2317
        %v2633 = vpack.c.b16 %v2325, %v2318
        %v2634 = vpack.c.b16 %v2326, %v2319
        %v2635 = vpack.c.b16 %v2327, %v2320
        %v2636 = vpack.c.b16 %v2328, %v2321
        %v2637 = vpack.c.b16 %v2329, %v2322
        %v2638 = vpack.c.b16 %v2330, %v2323
        %v2639 = vpack.c.b16 %v2338, %v2331
        %v2640 = vpack.c.b16 %v2339, %v2332
        %v2641 = vpack.c.b16 %v2340, %v2333
        %v2642 = vpack.c.b16 %v2341, %v2334
        %v2643 = vpack.c.b16 %v2342, %v2335
        %v2644 = vpack.c.b16 %v2343, %v2336
        %v2645 = vpack.c.b16 %v2344, %v2337
        %v2646 = vpack.c.b16 %v2352, %v2345
        %v2647 = vpack.c.b16 %v2353, %v2346
        %v2648 = vpack.c.b16 %v2354, %v2347
        %v2649 = vpack.c.b16 %v2355, %v2348
        %v2650 = vpack.c.b16 %v2356, %v2349
        %v2651 = vpack.c.b16 %v2357, %v2350
        %v2652 = vpack.c.b16 %v2358, %v2351
        %v2653 = vpack.c.b16 %v2366, %v2359
        %v2654 = vpack.c.b16 %v2367, %v2360
        %v2655 = vpack.c.b16 %v2368, %v2361
        %v2656 = vpack.c.b16 %v2369, %v2362
        %v2657 = vpack.c.b16 %v2370, %v2363
        %v2658 = vpack.c.b16 %v2371, %v2364
        %v2659 = vpack.c.b16 %v2372, %v2365
        %v2660 = vpack.c.b16 %v2380, %v2373
        %v2661 = vpack.c.b16 %v2381, %v2374
        %v2662 = vpack.c.b16 %v2382, %v2375
        %v2663 = vpack.c.b16 %v2383, %v2376
        %v2664 = vpack.c.b16 %v2384, %v2377
        %v2665 = vpack.c.b16 %v2385, %v2378
        %v2666 = vpack.c.b16 %v2386, %v2379
        %v2667 = vpack.c.b16 %v2394, %v2387
        %v2668 = vpack.c.b16 %v2395, %v2388
        %v2669 = vpack.c.b16 %v2396, %v2389
        %v2670 = vpack.c.b16 %v2397, %v2390
        %v2671 = vpack.c.b16 %v2398, %v2391
        %v2672 = vpack.c.b16 %v2399, %v2392
        %v2673 = vpack.c.b16 %v2400, %v2393
        %v2674 = vpack.c.b16 %v2408, %v2401
        %v2675 = vpack.c.b16 %v2409, %v2402
        %v2676 = vpack.c.b16 %v2410, %v2403
        %v2677 = vpack.c.b16 %v2411, %v2404
        %v2678 = vpack.c.b16 %v2412, %v2405
        %v2679 = vpack.c.b16 %v2413, %v2406
        %v2680 = vpack.c.b16 %v2414, %v2407
        %v2681 = vpack.c.b16 %v2422, %v2415
        %v2682 = vpack.c.b16 %v2423, %v2416
        %v2683 = vpack.c.b16 %v2424, %v2417
        %v2684 = vpack.c.b16 %v2425, %v2418
        %v2685 = vpack.c.b16 %v2426, %v2419
        %v2686 = vpack.c.b16 %v2427, %v2420
        %v2687 = vpack.c.b16 %v2428, %v2421
        %v2688 = vpack.c.b16 %v2436, %v2429
        %v2689 = vpack.c.b16 %v2437, %v2430
        %v2690 = vpack.c.b16 %v2438, %v2431
        %v2691 = vpack.c.b16 %v2439, %v2432
        %v2692 = vpack.c.b16 %v2440, %v2433
        %v2693 = vpack.c.b16 %v2441, %v2434
        %v2694 = vpack.c.b16 %v2442, %v2435
        %v2695 = vpack.c.b16 %v2450, %v2443
        %v2696 = vpack.c.b16 %v2451, %v2444
        %v2697 = vpack.c.b16 %v2452, %v2445
        %v2698 = vpack.c.b16 %v2453, %v2446
        %v2699 = vpack.c.b16 %v2454, %v2447
        %v2700 = vpack.c.b16 %v2455, %v2448
        %v2701 = vpack.c.b16 %v2456, %v2449
        %v2702 = vpack.c.b16 %v2464, %v2457
        %v2703 = vpack.c.b16 %v2465, %v2458
        %v2704 = vpack.c.b16 %v2466, %v2459
        %v2705 = vpack.c.b16 %v2467, %v2460
        %v2706 = vpack.c.b16 %v2468, %v2461
        %v2707 = vpack.c.b16 %v2469, %v2462
        %v2708 = vpack.c.b16 %v2470, %v2463
        %v2709 = vpack.c.b16 %v2478, %v2471
        %v2710 = vpack.c.b16 %v2479, %v2472
        %v2711 = vpack.c.b16 %v2480, %v2473
        %v2712 = vpack.c.b16 %v2481, %v2474
        %v2713 = vpack.c.b16 %v2482, %v2475
        %v2714 = vpack.c.b16 %v2483, %v2476
        %v2715 = vpack.c.b16 %v2484, %v2477
        %v2716 = vpack.c.b16 %v2492, %v2485
        %v2717 = vpack.c.b16 %v2493, %v2486
        %v2718 = vpack.c.b16 %v2494, %v2487
        %v2719 = vpack.c.b16 %v2495, %v2488
        %v2720 = vpack.c.b16 %v2496, %v2489
        %v2721 = vpack.c.b16 %v2497, %v2490
        %v2722 = vpack.c.b16 %v2498, %v2491
        %2947 = vmatprep.subr.bf16.mxu0 %v2500
        %2948 = vmatpush1.bf16.msra.mxu0 %v2499
        %2949 = vmatprep.subr.bf16.mxu0 %v2507
        %2950 = vmatpush1.bf16.msra.mxu0 %v2506
        %2951 = vmatprep.subr.bf16.mxu0 %v2514
        %2952 = vmatpush1.bf16.msra.mxu0 %v2513
        %2953 = vmatprep.subr.bf16.mxu0 %v2521
        %2954 = vmatpush1.bf16.msra.mxu0 %v2520
        %2955 = vmatprep.subr.bf16.mxu0 %v2528
        %2956 = vmatpush1.bf16.msra.mxu0 %v2527
        %2957 = vmatprep.subr.bf16.mxu0 %v2535
        %2958 = vmatpush1.bf16.msra.mxu0 %v2534
        %2959 = vmatprep.subr.bf16.mxu0 %v2542
        %2960 = vmatpush1.bf16.msra.mxu0 %v2541
        %2961 = vmatprep.subr.bf16.mxu0 %v2549
        %2962 = vmatpush1.bf16.msra.mxu0 %v2548
        %2963 = vmatprep.subr.bf16.mxu0 %v2556
        %2964 = vmatpush1.bf16.msra.mxu0 %v2555
        %2965 = vmatprep.subr.bf16.mxu0 %v2563
        %2966 = vmatpush1.bf16.msra.mxu0 %v2562
        %2967 = vmatprep.subr.bf16.mxu0 %v2570
        %2968 = vmatpush1.bf16.msra.mxu0 %v2569
        %2969 = vmatprep.subr.bf16.mxu0 %v2577
        %2970 = vmatpush1.bf16.msra.mxu0 %v2576
        %2971 = vmatprep.subr.bf16.mxu0 %v2584
        %2972 = vmatpush1.bf16.msra.mxu0 %v2583
        %2973 = vmatprep.subr.bf16.mxu0 %v2591
        %2974 = vmatpush1.bf16.msra.mxu0 %v2590
        %2975 = vmatprep.subr.bf16.mxu0 %v2598
        %2976 = vmatpush1.bf16.msra.mxu0 %v2597
        %2977 = vmatprep.subr.bf16.mxu0 %v2605
        %2978 = vmatpush1.bf16.msra.mxu0 %v2604
        %2979 = vmatprep.mubr.bf16.mxu0 %v1752
        %2980 = vmatmul.mubr.bf16.gmra.mrb[0].mxu0 %v1751
        %v2981 = vpop.f32.mrb[0].mxu0
        %v2982 = vadd.f32 %v1763, %v2981
        %v2983 = vpop.f32.mrb[0].mxu0
        %v2984 = vadd.f32 %v1767, %v2983
        %v2985 = vpop.f32.mrb[0].mxu0
        %v2986 = vadd.f32 %v1763, %v2985
        %v2987 = vpop.f32.mrb[0].mxu0
        %v2988 = vadd.f32 %v1767, %v2987
        %2989 = vmatprep.mubr.bf16.mxu0 %v1756
        %2990 = vmatmul.mubr.bf16.gmra.mrb[0].mxu0 %v1755
        %v2991 = vpop.f32.mrb[0].mxu0
        %v2992 = vadd.f32 %v1763, %v2991
        %v2993 = vpop.f32.mrb[0].mxu0
        %v2994 = vadd.f32 %v1767, %v2993
        %v2995 = vpop.f32.mrb[0].mxu0
        %v2996 = vadd.f32 %v1763, %v2995
        %v2997 = vpop.f32.mrb[0].mxu0
        %v2998 = vadd.f32 %v1767, %v2997
        %2999 = vdwg.mxu0
        %3000 = vmatprep.subr.bf16.mxu0 %v2612
        %3001 = vmatpush1.bf16.msra.mxu0 %v2611
        %3002 = vmatprep.subr.bf16.mxu0 %v2619
        %3003 = vmatpush1.bf16.msra.mxu0 %v2618
        %3004 = vmatprep.subr.bf16.mxu0 %v2626
        %3005 = vmatpush1.bf16.msra.mxu0 %v2625
        %3006 = vmatprep.subr.bf16.mxu0 %v2633
        %3007 = vmatpush1.bf16.msra.mxu0 %v2632
        %3008 = vmatprep.subr.bf16.mxu0 %v2640
        %3009 = vmatpush1.bf16.msra.mxu0 %v2639
        %3010 = vmatprep.subr.bf16.mxu0 %v2647
        %3011 = vmatpush1.bf16.msra.mxu0 %v2646
        %3012 = vmatprep.subr.bf16.mxu0 %v2654
        %3013 = vmatpush1.bf16.msra.mxu0 %v2653
        %3014 = vmatprep.subr.bf16.mxu0 %v2661
        %3015 = vmatpush1.bf16.msra.mxu0 %v2660
        %3016 = vmatprep.subr.bf16.mxu0 %v2668
        %3017 = vmatpush1.bf16.msra.mxu0 %v2667
        %3018 = vmatprep.subr.bf16.mxu0 %v2675
        %3019 = vmatpush1.bf16.msra.mxu0 %v2674
        %3020 = vmatprep.subr.bf16.mxu0 %v2682
        %3021 = vmatpush1.bf16.msra.mxu0 %v2681
        %3022 = vmatprep.subr.bf16.mxu0 %v2689
        %3023 = vmatpush1.bf16.msra.mxu0 %v2688
        %3024 = vmatprep.subr.bf16.mxu0 %v2696
        %3025 = vmatpush1.bf16.msra.mxu0 %v2695
        %3026 = vmatprep.subr.bf16.mxu0 %v2703
        %3027 = vmatpush1.bf16.msra.mxu0 %v2702
        %3028 = vmatprep.subr.bf16.mxu0 %v2710
        %3029 = vmatpush1.bf16.msra.mxu0 %v2709
        %3030 = vmatprep.subr.bf16.mxu0 %v2717
        %3031 = vmatpush1.bf16.msra.mxu0 %v2716
        %3032 = vmatprep.mubr.bf16.mxu0 %v1754
        %3033 = vmatmul.mubr.bf16.gmra.mrb[0].mxu0 %v1753
        %v3034 = vpop.f32.mrb[0].mxu0
        %v3035 = vadd.f32 %v2982, %v3034
        %v3036 = vpop.f32.mrb[0].mxu0
        %v3037 = vadd.f32 %v2984, %v3036
        %v3038 = vpop.f32.mrb[0].mxu0
        %v3039 = vadd.f32 %v2986, %v3038
        %v3040 = vpop.f32.mrb[0].mxu0
        %v3041 = vadd.f32 %v2988, %v3040
        %3042 = vmatprep.mubr.bf16.mxu0 %v1758
        %3043 = vmatmul.mubr.bf16.gmra.mrb[0].mxu0 %v1757
        %v3044 = vpop.f32.mrb[0].mxu0
        %v3045 = vadd.f32 %v2992, %v3044
        %v3046 = vpop.f32.mrb[0].mxu0
        %v3047 = vadd.f32 %v2994, %v3046
        %v3048 = vpop.f32.mrb[0].mxu0
        %v3049 = vadd.f32 %v2996, %v3048
        %v3050 = vpop.f32.mrb[0].mxu0
        %v3051 = vadd.f32 %v2998, %v3050
        %3052 = vdwg.mxu0
        %3053 = vmatprep.subr.bf16.mxu0 %v2502
        %3054 = vmatpush1.bf16.msra.mxu0 %v2501
        %3055 = vmatprep.subr.bf16.mxu0 %v2509
        %3056 = vmatpush1.bf16.msra.mxu0 %v2508
        %3057 = vmatprep.subr.bf16.mxu0 %v2516
        %3058 = vmatpush1.bf16.msra.mxu0 %v2515
        %3059 = vmatprep.subr.bf16.mxu0 %v2523
        %3060 = vmatpush1.bf16.msra.mxu0 %v2522
        %3061 = vmatprep.subr.bf16.mxu0 %v2530
        %3062 = vmatpush1.bf16.msra.mxu0 %v2529
        %3063 = vmatprep.subr.bf16.mxu0 %v2537
        %3064 = vmatpush1.bf16.msra.mxu0 %v2536
        %3065 = vmatprep.subr.bf16.mxu0 %v2544
        %3066 = vmatpush1.bf16.msra.mxu0 %v2543
        %3067 = vmatprep.subr.bf16.mxu0 %v2551
        %3068 = vmatpush1.bf16.msra.mxu0 %v2550
        %3069 = vmatprep.subr.bf16.mxu0 %v2558
        %3070 = vmatpush1.bf16.msra.mxu0 %v2557
        %3071 = vmatprep.subr.bf16.mxu0 %v2565
        %3072 = vmatpush1.bf16.msra.mxu0 %v2564
        %3073 = vmatprep.subr.bf16.mxu0 %v2572
        %3074 = vmatpush1.bf16.msra.mxu0 %v2571
        %3075 = vmatprep.subr.bf16.mxu0 %v2579
        %3076 = vmatpush1.bf16.msra.mxu0 %v2578
        %3077 = vmatprep.subr.bf16.mxu0 %v2586
        %3078 = vmatpush1.bf16.msra.mxu0 %v2585
        %3079 = vmatprep.subr.bf16.mxu0 %v2593
        %3080 = vmatpush1.bf16.msra.mxu0 %v2592
        %3081 = vmatprep.subr.bf16.mxu0 %v2600
        %3082 = vmatpush1.bf16.msra.mxu0 %v2599
        %3083 = vmatprep.subr.bf16.mxu0 %v2607
        %3084 = vmatpush1.bf16.msra.mxu0 %v2606
        %3085 = vmatprep.mubr.bf16.mxu0 %v1752
        %3086 = vmatmul.mubr.bf16.gmra.mrb[0].mxu0 %v1751
        %v3087 = vpop.f32.mrb[0].mxu0
        %v3088 = vadd.f32 %v1771, %v3087
        %v3089 = vpop.f32.mrb[0].mxu0
        %v3090 = vadd.f32 %v1775, %v3089
        %v3091 = vpop.f32.mrb[0].mxu0
        %v3092 = vadd.f32 %v1771, %v3091
        %v3093 = vpop.f32.mrb[0].mxu0
        %v3094 = vadd.f32 %v1775, %v3093
        %3095 = vmatprep.mubr.bf16.mxu0 %v1756
        %3096 = vmatmul.mubr.bf16.gmra.mrb[0].mxu0 %v1755
        %v3097 = vpop.f32.mrb[0].mxu0
        %v3098 = vadd.f32 %v1771, %v3097
        %v3099 = vpop.f32.mrb[0].mxu0
        %v3100 = vadd.f32 %v1775, %v3099
        %v3101 = vpop.f32.mrb[0].mxu0
        %v3102 = vadd.f32 %v1771, %v3101
        %v3103 = vpop.f32.mrb[0].mxu0
        %v3104 = vadd.f32 %v1775, %v3103
        %3105 = vdwg.mxu0
        %3106 = vmatprep.subr.bf16.mxu0 %v2614
        %3107 = vmatpush1.bf16.msra.mxu0 %v2613
        %3108 = vmatprep.subr.bf16.mxu0 %v2621
        %3109 = vmatpush1.bf16.msra.mxu0 %v2620
        %3110 = vmatprep.subr.bf16.mxu0 %v2628
        %3111 = vmatpush1.bf16.msra.mxu0 %v2627
        %3112 = vmatprep.subr.bf16.mxu0 %v2635
        %3113 = vmatpush1.bf16.msra.mxu0 %v2634
        %3114 = vmatprep.subr.bf16.mxu0 %v2642
        %3115 = vmatpush1.bf16.msra.mxu0 %v2641
        %3116 = vmatprep.subr.bf16.mxu0 %v2649
        %3117 = vmatpush1.bf16.msra.mxu0 %v2648
        %3118 = vmatprep.subr.bf16.mxu0 %v2656
        %3119 = vmatpush1.bf16.msra.mxu0 %v2655
        %3120 = vmatprep.subr.bf16.mxu0 %v2663
        %3121 = vmatpush1.bf16.msra.mxu0 %v2662
        %3122 = vmatprep.subr.bf16.mxu0 %v2670
        %3123 = vmatpush1.bf16.msra.mxu0 %v2669
        %3124 = vmatprep.subr.bf16.mxu0 %v2677
        %3125 = vmatpush1.bf16.msra.mxu0 %v2676
        %3126 = vmatprep.subr.bf16.mxu0 %v2684
        %3127 = vmatpush1.bf16.msra.mxu0 %v2683
        %3128 = vmatprep.subr.bf16.mxu0 %v2691
        %3129 = vmatpush1.bf16.msra.mxu0 %v2690
        %3130 = vmatprep.subr.bf16.mxu0 %v2698
        %3131 = vmatpush1.bf16.msra.mxu0 %v2697
        %3132 = vmatprep.subr.bf16.mxu0 %v2705
        %3133 = vmatpush1.bf16.msra.mxu0 %v2704
        %3134 = vmatprep.subr.bf16.mxu0 %v2712
        %3135 = vmatpush1.bf16.msra.mxu0 %v2711
        %3136 = vmatprep.subr.bf16.mxu0 %v2719
        %3137 = vmatpush1.bf16.msra.mxu0 %v2718
        %3138 = vmatprep.mubr.bf16.mxu0 %v1754
        %3139 = vmatmul.mubr.bf16.gmra.mrb[0].mxu0 %v1753
        %v3140 = vpop.f32.mrb[0].mxu0
        %v3141 = vadd.f32 %v3088, %v3140
        %v3142 = vpop.f32.mrb[0].mxu0
        %v3143 = vadd.f32 %v3090, %v3142
        %v3144 = vpop.f32.mrb[0].mxu0
        %v3145 = vadd.f32 %v3092, %v3144
        %v3146 = vpop.f32.mrb[0].mxu0
        %v3147 = vadd.f32 %v3094, %v3146
        %3148 = vmatprep.mubr.bf16.mxu0 %v1758
        %3149 = vmatmul.mubr.bf16.gmra.mrb[0].mxu0 %v1757
        %v3150 = vpop.f32.mrb[0].mxu0
        %v3151 = vadd.f32 %v3098, %v3150
        %v3152 = vpop.f32.mrb[0].mxu0
        %v3153 = vadd.f32 %v3100, %v3152
        %v3154 = vpop.f32.mrb[0].mxu0
        %v3155 = vadd.f32 %v3102, %v3154
        %v3156 = vpop.f32.mrb[0].mxu0
        %v3157 = vadd.f32 %v3104, %v3156
        %3158 = vdwg.mxu0
        %3159 = vmatprep.subr.bf16.mxu0 %v2504
        %3160 = vmatpush1.bf16.msra.mxu0 %v2503
        %3161 = vmatprep.subr.bf16.mxu0 %v2511
        %3162 = vmatpush1.bf16.msra.mxu0 %v2510
        %3163 = vmatprep.subr.bf16.mxu0 %v2518
        %3164 = vmatpush1.bf16.msra.mxu0 %v2517
        %3165 = vmatprep.subr.bf16.mxu0 %v2525
        %3166 = vmatpush1.bf16.msra.mxu0 %v2524
        %3167 = vmatprep.subr.bf16.mxu0 %v2532
        %3168 = vmatpush1.bf16.msra.mxu0 %v2531
        %3169 = vmatprep.subr.bf16.mxu0 %v2539
        %3170 = vmatpush1.bf16.msra.mxu0 %v2538
        %3171 = vmatprep.subr.bf16.mxu0 %v2546
        %3172 = vmatpush1.bf16.msra.mxu0 %v2545
        %3173 = vmatprep.subr.bf16.mxu0 %v2553
        %3174 = vmatpush1.bf16.msra.mxu0 %v2552
        %3175 = vmatprep.subr.bf16.mxu0 %v2560
        %3176 = vmatpush1.bf16.msra.mxu0 %v2559
        %3177 = vmatprep.subr.bf16.mxu0 %v2567
        %3178 = vmatpush1.bf16.msra.mxu0 %v2566
        %3179 = vmatprep.subr.bf16.mxu0 %v2574
        %3180 = vmatpush1.bf16.msra.mxu0 %v2573
        %3181 = vmatprep.subr.bf16.mxu0 %v2581
        %3182 = vmatpush1.bf16.msra.mxu0 %v2580
        %3183 = vmatprep.subr.bf16.mxu0 %v2588
        %3184 = vmatpush1.bf16.msra.mxu0 %v2587
        %3185 = vmatprep.subr.bf16.mxu0 %v2595
        %3186 = vmatpush1.bf16.msra.mxu0 %v2594
        %3187 = vmatprep.subr.bf16.mxu0 %v2602
        %3188 = vmatpush1.bf16.msra.mxu0 %v2601
        %3189 = vmatprep.subr.bf16.mxu0 %v2609
        %3190 = vmatpush1.bf16.msra.mxu0 %v2608
        %3191 = vmatprep.mubr.bf16.mxu0 %v1752
        %3192 = vmatmul.mubr.bf16.gmra.mrb[0].mxu0 %v1751
        %v3193 = vpop.f32.mrb[0].mxu0
        %v3194 = vadd.f32 %v1779, %v3193
        %v3195 = vpop.f32.mrb[0].mxu0
        %v3196 = vadd.f32 %v1783, %v3195
        %v3197 = vpop.f32.mrb[0].mxu0
        %v3198 = vadd.f32 %v1779, %v3197
        %v3199 = vpop.f32.mrb[0].mxu0
        %v3200 = vadd.f32 %v1783, %v3199
        %3201 = vmatprep.mubr.bf16.mxu0 %v1756
        %3202 = vmatmul.mubr.bf16.gmra.mrb[0].mxu0 %v1755
        %v3203 = vpop.f32.mrb[0].mxu0
        %v3204 = vadd.f32 %v1779, %v3203
        %v3205 = vpop.f32.mrb[0].mxu0
        %v3206 = vadd.f32 %v1783, %v3205
        %v3207 = vpop.f32.mrb[0].mxu0
        %v3208 = vadd.f32 %v1779, %v3207
        %v3209 = vpop.f32.mrb[0].mxu0
        %v3210 = vadd.f32 %v1783, %v3209
        %3211 = vdwg.mxu0
        %3212 = vmatprep.subr.bf16.mxu0 %v2616
        %3213 = vmatpush1.bf16.msra.mxu0 %v2615
        %3214 = vmatprep.subr.bf16.mxu0 %v2623
        %3215 = vmatpush1.bf16.msra.mxu0 %v2622
        %3216 = vmatprep.subr.bf16.mxu0 %v2630
        %3217 = vmatpush1.bf16.msra.mxu0 %v2629
        %3218 = vmatprep.subr.bf16.mxu0 %v2637
        %3219 = vmatpush1.bf16.msra.mxu0 %v2636
        %3220 = vmatprep.subr.bf16.mxu0 %v2644
        %3221 = vmatpush1.bf16.msra.mxu0 %v2643
        %3222 = vmatprep.subr.bf16.mxu0 %v2651
        %3223 = vmatpush1.bf16.msra.mxu0 %v2650
        %3224 = vmatprep.subr.bf16.mxu0 %v2658
        %3225 = vmatpush1.bf16.msra.mxu0 %v2657
        %3226 = vmatprep.subr.bf16.mxu0 %v2665
        %3227 = vmatpush1.bf16.msra.mxu0 %v2664
        %3228 = vmatprep.subr.bf16.mxu0 %v2672
        %3229 = vmatpush1.bf16.msra.mxu0 %v2671
        %3230 = vmatprep.subr.bf16.mxu0 %v2679
        %3231 = vmatpush1.bf16.msra.mxu0 %v2678
        %3232 = vmatprep.subr.bf16.mxu0 %v2686
        %3233 = vmatpush1.bf16.msra.mxu0 %v2685
        %3234 = vmatprep.subr.bf16.mxu0 %v2693
        %3235 = vmatpush1.bf16.msra.mxu0 %v2692
        %3236 = vmatprep.subr.bf16.mxu0 %v2700
        %3237 = vmatpush1.bf16.msra.mxu0 %v2699
        %3238 = vmatprep.subr.bf16.mxu0 %v2707
        %3239 = vmatpush1.bf16.msra.mxu0 %v2706
        %3240 = vmatprep.subr.bf16.mxu0 %v2714
        %3241 = vmatpush1.bf16.msra.mxu0 %v2713
        %3242 = vmatprep.subr.bf16.mxu0 %v2721
        %3243 = vmatpush1.bf16.msra.mxu0 %v2720
        %3244 = vmatprep.mubr.bf16.mxu0 %v1754
        %3245 = vmatmul.mubr.bf16.gmra.mrb[0].mxu0 %v1753
        %v3246 = vpop.f32.mrb[0].mxu0
        %v3247 = vadd.f32 %v3194, %v3246
        %v3248 = vpop.f32.mrb[0].mxu0
        %v3249 = vadd.f32 %v3196, %v3248
        %v3250 = vpop.f32.mrb[0].mxu0
        %v3251 = vadd.f32 %v3198, %v3250
        %v3252 = vpop.f32.mrb[0].mxu0
        %v3253 = vadd.f32 %v3200, %v3252
        %3254 = vmatprep.mubr.bf16.mxu0 %v1758
        %3255 = vmatmul.mubr.bf16.gmra.mrb[0].mxu0 %v1757
        %v3256 = vpop.f32.mrb[0].mxu0
        %v3257 = vadd.f32 %v3204, %v3256
        %v3258 = vpop.f32.mrb[0].mxu0
        %v3259 = vadd.f32 %v3206, %v3258
        %v3260 = vpop.f32.mrb[0].mxu0
        %v3261 = vadd.f32 %v3208, %v3260
        %v3262 = vpop.f32.mrb[0].mxu0
        %v3263 = vadd.f32 %v3210, %v3262
        %3264 = vdwg.mxu0
        %3265 = vmatprep.subr.bf16.mxu0 0
        %3266 = vmatpush1.bf16.msra.mxu0 %v2505
        %3267 = vmatprep.subr.bf16.mxu0 0
        %3268 = vmatpush1.bf16.msra.mxu0 %v2512
        %3269 = vmatprep.subr.bf16.mxu0 0
        %3270 = vmatpush1.bf16.msra.mxu0 %v2519
        %3271 = vmatprep.subr.bf16.mxu0 0
        %3272 = vmatpush1.bf16.msra.mxu0 %v2526
        %3273 = vmatprep.subr.bf16.mxu0 0
        %3274 = vmatpush1.bf16.msra.mxu0 %v2533
        %3275 = vmatprep.subr.bf16.mxu0 0
        %3276 = vmatpush1.bf16.msra.mxu0 %v2540
        %3277 = vmatprep.subr.bf16.mxu0 0
        %3278 = vmatpush1.bf16.msra.mxu0 %v2547
        %3279 = vmatprep.subr.bf16.mxu0 0
        %3280 = vmatpush1.bf16.msra.mxu0 %v2554
        %3281 = vmatprep.subr.bf16.mxu0 0
        %3282 = vmatpush1.bf16.msra.mxu0 %v2561
        %3283 = vmatprep.subr.bf16.mxu0 0
        %3284 = vmatpush1.bf16.msra.mxu0 %v2568
        %3285 = vmatprep.subr.bf16.mxu0 0
        %3286 = vmatpush1.bf16.msra.mxu0 %v2575
        %3287 = vmatprep.subr.bf16.mxu0 0
        %3288 = vmatpush1.bf16.msra.mxu0 %v2582
        %3289 = vmatprep.subr.bf16.mxu0 0
        %3290 = vmatpush1.bf16.msra.mxu0 %v2589
        %3291 = vmatprep.subr.bf16.mxu0 0
        %3292 = vmatpush1.bf16.msra.mxu0 %v2596
        %3293 = vmatprep.subr.bf16.mxu0 0
        %3294 = vmatpush1.bf16.msra.mxu0 %v2603
        %3295 = vmatprep.subr.bf16.mxu0 0
        %3296 = vmatpush1.bf16.msra.mxu0 %v2610
        %3297 = vmatprep.mubr.bf16.mxu0 %v1752
        %3298 = vmatmul.mubr.bf16.gmra.mrb[0].mxu0 %v1751
        %v3299 = vpop.f32.mrb[0].mxu0
        %v3300 = vadd.f32 %v1787, %v3299
        %v3301 = vpop.f32.mrb[0].mxu0
        %v3302 = vpop.f32.mrb[0].mxu0
        %v3303 = vadd.f32 %v1787, %v3302
        %v3304 = vpop.f32.mrb[0].mxu0
        %3305 = vmatprep.mubr.bf16.mxu0 %v1756
        %3306 = vmatmul.mubr.bf16.gmra.mrb[0].mxu0 %v1755
        %v3307 = vpop.f32.mrb[0].mxu0
        %v3308 = vadd.f32 %v1787, %v3307
        %v3309 = vpop.f32.mrb[0].mxu0
        %v3310 = vpop.f32.mrb[0].mxu0
        %v3311 = vadd.f32 %v1787, %v3310
        %v3312 = vpop.f32.mrb[0].mxu0
        %3313 = vdwg.mxu0
        %3314 = vmatprep.subr.bf16.mxu0 0
        %3315 = vmatpush1.bf16.msra.mxu0 %v2617
        %3316 = vmatprep.subr.bf16.mxu0 0
        %3317 = vmatpush1.bf16.msra.mxu0 %v2624
        %3318 = vmatprep.subr.bf16.mxu0 0
        %3319 = vmatpush1.bf16.msra.mxu0 %v2631
        %3320 = vmatprep.subr.bf16.mxu0 0
        %3321 = vmatpush1.bf16.msra.mxu0 %v2638
        %3322 = vmatprep.subr.bf16.mxu0 0
        %3323 = vmatpush1.bf16.msra.mxu0 %v2645
        %3324 = vmatprep.subr.bf16.mxu0 0
        %3325 = vmatpush1.bf16.msra.mxu0 %v2652
        %3326 = vmatprep.subr.bf16.mxu0 0
        %3327 = vmatpush1.bf16.msra.mxu0 %v2659
        %3328 = vmatprep.subr.bf16.mxu0 0
        %3329 = vmatpush1.bf16.msra.mxu0 %v2666
        %3330 = vmatprep.subr.bf16.mxu0 0
        %3331 = vmatpush1.bf16.msra.mxu0 %v2673
        %3332 = vmatprep.subr.bf16.mxu0 0
        %3333 = vmatpush1.bf16.msra.mxu0 %v2680
        %3334 = vmatprep.subr.bf16.mxu0 0
        %3335 = vmatpush1.bf16.msra.mxu0 %v2687
        %3336 = vmatprep.subr.bf16.mxu0 0
        %3337 = vmatpush1.bf16.msra.mxu0 %v2694
        %3338 = vmatprep.subr.bf16.mxu0 0
        %3339 = vmatpush1.bf16.msra.mxu0 %v2701
        %3340 = vmatprep.subr.bf16.mxu0 0
        %3341 = vmatpush1.bf16.msra.mxu0 %v2708
        %3342 = vmatprep.subr.bf16.mxu0 0
        %3343 = vmatpush1.bf16.msra.mxu0 %v2715
        %3344 = vmatprep.subr.bf16.mxu0 0
        %3345 = vmatpush1.bf16.msra.mxu0 %v2722
        %3346 = vmatprep.mubr.bf16.mxu0 %v1754
        %3347 = vmatmul.mubr.bf16.gmra.mrb[0].mxu0 %v1753
        %v3348 = vpop.f32.mrb[0].mxu0
        %v3349 = vadd.f32 %v3300, %v3348
        %v3350 = vpop.f32.mrb[0].mxu0
        %v3351 = vpop.f32.mrb[0].mxu0
        %v3352 = vadd.f32 %v3303, %v3351
        %v3353 = vpop.f32.mrb[0].mxu0
        %3354 = vmatprep.mubr.bf16.mxu0 %v1758
        %3355 = vmatmul.mubr.bf16.gmra.mrb[0].mxu0 %v1757
        %v3356 = vpop.f32.mrb[0].mxu0
        %v3357 = vadd.f32 %v3308, %v3356
        %v3358 = vpop.f32.mrb[0].mxu0
        %v3359 = vpop.f32.mrb[0].mxu0
        %v3360 = vadd.f32 %v3311, %v3359
        %v3361 = vpop.f32.mrb[0].mxu0
        %3362 = vdwg.mxu0
        %v3363 = vtanh.pop %v3035
        %v3364 = vtanh.pop %v3037
        %v3365 = vtanh.pop %v3141
        %v3366 = vtanh.pop %v3143
        %v3367 = vtanh.pop %v3247
        %v3368 = vtanh.pop %v3249
        %v3369 = vtanh.pop %v3349
        %v3370 = vtanh.pop %v3039
        %v3371 = vtanh.pop %v3041
        %v3372 = vtanh.pop %v3145
        %v3373 = vtanh.pop %v3147
        %v3374 = vtanh.pop %v3251
        %v3375 = vtanh.pop %v3253
        %v3376 = vtanh.pop %v3352
        %v3377 = vtanh.pop %v3045
        %v3378 = vtanh.pop %v3047
        %v3379 = vtanh.pop %v3151
        %v3380 = vtanh.pop %v3153
        %v3381 = vtanh.pop %v3257
        %v3382 = vtanh.pop %v3259
        %v3383 = vtanh.pop %v3357
        %v3384 = vtanh.pop %v3049
        %v3385 = vtanh.pop %v3051
        %v3386 = vtanh.pop %v3155
        %v3387 = vtanh.pop %v3157
        %v3388 = vtanh.pop %v3261
        %v3389 = vtanh.pop %v3263
        %v3390 = vtanh.pop %v3360
        %3391 = vst [vmem:[%s244] sm:$0xff] %v3363
        %3392 = vst [vmem:[%s244 + $0x8] sm:$0xff] %v3364
        %3393 = vst [vmem:[%s244 + $0x10] sm:$0xff] %v3365
        %3394 = vst [vmem:[%s244 + $0x18] sm:$0xff] %v3366
        %3395 = vst [vmem:[%s244 + $0x20] sm:$0xff] %v3367
        %3396 = vst [vmem:[%s244 + $0x28] sm:$0xff] %v3368
        %vm3397 = vcmask 130048
        %3398 = vst.msk [vmem:[%s244 + $0x30] sm:$0xff] %vm3397, %v3369
        %3399 = vst [vmem:[%s244 + $0x38] sm:$0xff] %v3370
        %3400 = vst [vmem:[%s244 + $0x40] sm:$0xff] %v3371
        %3401 = vst [vmem:[%s244 + $0x48] sm:$0xff] %v3372
        %3402 = vst [vmem:[%s244 + $0x50] sm:$0xff] %v3373
        %3403 = vst [vmem:[%s244 + $0x58] sm:$0xff] %v3374
        %3404 = vst [vmem:[%s244 + $0x60] sm:$0xff] %v3375
        %3405 = vst.msk [vmem:[%s244 + $0x68] sm:$0xff] %vm3397, %v3376
        %3406 = vst [vmem:[%s244 + $0x70] sm:$0xff] %v3377
        %3407 = vst [vmem:[%s244 + $0x78] sm:$0xff] %v3378
        %3408 = vst [vmem:[%s244 + $0x80] sm:$0xff] %v3379
        %3409 = vst [vmem:[%s244 + $0x88] sm:$0xff] %v3380
        %3410 = vst [vmem:[%s244 + $0x90] sm:$0xff] %v3381
        %3411 = vst [vmem:[%s244 + $0x98] sm:$0xff] %v3382
        %3412 = vst.msk [vmem:[%s244 + $0xa0] sm:$0xff] %vm3397, %v3383
        %3413 = vst [vmem:[%s244 + $0xa8] sm:$0xff] %v3384
        %3414 = vst [vmem:[%s244 + $0xb0] sm:$0xff] %v3385
        %3415 = vst [vmem:[%s244 + $0xb8] sm:$0xff] %v3386
        %3416 = vst [vmem:[%s244 + $0xc0] sm:$0xff] %v3387
        %3417 = vst [vmem:[%s244 + $0xc8] sm:$0xff] %v3388
        %3418 = vst [vmem:[%s244 + $0xd0] sm:$0xff] %v3389
        %3419 = vst.msk [vmem:[%s244 + $0xd8] sm:$0xff] %vm3397, %v3390
        %s3420 = sand.u32 %s159, 1
        %s3421 = scalar_lea.sflag [#allocation4], %s3420
        %s3422 = sand.u32 %s159, 1
        %s3423 = smul.addr %s3422, 224
        %s3424 = scalar_lea.vmem [#allocation3], %s3423
        // Predicated region
        $region45: #{tpu_custom_call.1} parent=43 // pred_check
          %p3425 = pneg %p169
        $region46: #{tpu_custom_call.1} parent=43 // pred_check_branch
          %3427 = sbr.rel (%p3425) target = $region48
        $region47: #{tpu_custom_call.1} parent=43 // pred_region
          %s3429 = ssub.s32 3584, 3584
          %3430 = vsyncadd %s3421, %s3429
          %s3431 = smul.addr %s20, 28
          %s3432 = smul.addr %s3431, 128
          %s3433 = scalar_lea.hbm %s6, %s3432
          %s3434 = sshll.u32 %s3424, 4
          %s3435 = int_to_ptr.vmem [resolvable:$true] %s3434
          %3440 = dma.vmem_to_hbm [thread:$0]  %s3435, 3584, %s3433, %s3421, 896, 896, 56
        $region48: #{tpu_custom_call.1} parent=43 // pred_fallthru
          _
      $region44: #{tpu_custom_call.1} parent=5 // pred_fallthru
        _
      %p3441 = scmp.le.s32.totalorder 2, %s15
      // Predicated region
      $region49: #{tpu_custom_call.1} parent=5 // pred_check
        %p3442 = pneg %p3441
      $region50: #{tpu_custom_call.1} parent=5 // pred_check_branch
        %3444 = sbr.rel (%p3442) target = $region52
      $region51: #{tpu_custom_call.1} parent=5 // pred_region
        %s3445 = ssub.s32 %s15, 2
        // Predicated region
        $region53: #{tpu_custom_call.1} parent=51 // pred_check
          %p3446 = pneg %p175
        $region54: #{tpu_custom_call.1} parent=51 // pred_check_branch
          %3448 = sbr.rel (%p3446) target = $region56
        $region55: #{tpu_custom_call.1} parent=51 // pred_region
          %s3449 = sand.u32 %s160, 1
          %s3450 = scalar_lea.sflag [#allocation4], %s3449
          %s3451 = sand.u32 %s160, 1
          %s3452 = smul.addr %s3451, 224
          %s3453 = scalar_lea.vmem [#allocation3], %s3452
          %3454 = dma.done %s3450, 3584
        $region56: #{tpu_custom_call.1} parent=51 // pred_fallthru
          _
      $region52: #{tpu_custom_call.1} parent=5 // pred_fallthru
        _
    $region6: #{tpu_custom_call.1} parent=1 // loop_footer
      %s19 = sadd.s32 1, %s15
    $region7: #{tpu_custom_call.1} parent=1 // loop_footer_branch
      %14 = sbr.rel target = $region3
    $region8: #{tpu_custom_call.1} parent=1 // loop_exit
      _
    %3455 = vsyncpa [#allocation4], 1
    %s3456 = scalar_lea.sflag [#allocation4], 1
    %3457 = vsyncpa %s3456, 1

</llo_original>
